<compile_context>
chip_gen: v7x
topology: tpu7x:2x2x1
jax: 0.10.0
libtpu: 0.0.40
codegen_flags: <defaults>
</compile_context>

<pallas_src>
import functools

import numpy as np
import jax
import jax.numpy as jnp
from jax.experimental import pallas as pl
from jax.experimental.pallas import tpu as pltpu

_VMEM_LIMIT = 32 * 1024 * 1024  # safe on v5e/v6e/v7x; kernels use far less


# ----------------------------------------------------------------------------
# Fused conv front-end kernel (4 layers, one pallas_call)
# ----------------------------------------------------------------------------
def _conv_frontend_kernel(x_ref,
                          m1_ref, s1_ref, b1_ref,
                          m2_ref, s2_ref, b2_ref,
                          m3_ref, s3_ref, b3_ref,
                          m4_ref, s4_ref, b4_ref,
                          o_ref):
    # Layer 1: ConvTranspose1d(1, dim//2, 4, s=2, p=1) -> Sigmoid -> BatchNorm1d
    h = jnp.dot(x_ref[...].astype(jnp.bfloat16), m1_ref[...],
                preferred_element_type=jnp.float32)
    h = 0.5 * (jnp.tanh(0.5 * h) + 1.0)          # stable sigmoid (EUP tanh)
    h = h * s1_ref[...] + b1_ref[...]
    # Layer 2: ConvTranspose1d(dim//2, dim//2, 5, s=1, p=2) -> ReLU -> BatchNorm1d
    h = jnp.dot(h.astype(jnp.bfloat16), m2_ref[...],
                preferred_element_type=jnp.float32)
    h = jnp.maximum(h, 0.0)
    h = h * s2_ref[...] + b2_ref[...]
    # Layer 3: ConvBlock(dim//2, dim, 5, p=2): Conv1d -> BN -> ReLU
    h = jnp.dot(h.astype(jnp.bfloat16), m3_ref[...],
                preferred_element_type=jnp.float32)
    h = jnp.maximum(h * s3_ref[...] + b3_ref[...], 0.0)
    # Layer 4: ConvBlock(dim, dim, 5, p=2): Conv1d -> BN -> ReLU
    h = jnp.dot(h.astype(jnp.bfloat16), m4_ref[...],
                preferred_element_type=jnp.float32)
    h = jnp.maximum(h * s4_ref[...] + b4_ref[...], 0.0)
    o_ref[...] = h.astype(o_ref.dtype)


def conv_frontend(x, mats, scales, shifts):
    """x: (N, Cin*L_in) f32 channel-major; returns (N, Cout*L_out) f32 (NCL-flat)."""
    N, k_in = x.shape
    d_out = mats[-1].shape[1]
    tok_tile = 8 if N % 8 == 0 else N
    grid = (N // tok_tile,)

    args = [x]
    in_specs = [pl.BlockSpec((tok_tile, k_in), lambda i: (i, 0))]
    for m, s, b in zip(mats, scales, shifts):
        args += [m, s, b]
        in_specs += [
            pl.BlockSpec(m.shape, lambda i: (0, 0)),
            pl.BlockSpec(s.shape, lambda i: (0, 0)),
            pl.BlockSpec(b.shape, lambda i: (0, 0)),
        ]
    return pl.pallas_call(
        _conv_frontend_kernel,
        grid=grid,
        in_specs=in_specs,
        out_specs=pl.BlockSpec((tok_tile, d_out), lambda i: (i, 0)),
        out_shape=jax.ShapeDtypeStruct((N, d_out), jnp.float32),
        compiler_params=pltpu.CompilerParams(
            dimension_semantics=("parallel",),
            vmem_limit_bytes=_VMEM_LIMIT),
    )(*args)


# ----------------------------------------------------------------------------
# Transformer encoder layer (pre-LN, dropout=0, ReLU FFN), one batch per grid step
# ----------------------------------------------------------------------------
def _encoder_layer_kernel(x_ref, ln1w_ref, ln1b_ref, wqkv_ref, bqkv_ref,
                          wo_ref, bo_ref, ln2w_ref, ln2b_ref,
                          w1_ref, b1_ref, w2_ref, b2_ref, o_ref, *, H):
    T, D = x_ref.shape
    hd = D // H
    eps = 1e-5
    x = x_ref[...]                                        # (T, D) f32 residual

    # ---- self-attention block: x + MHA(LN1(x)) ----
    mu = jnp.mean(x, axis=-1, keepdims=True)
    xc = x - mu
    var = jnp.mean(xc * xc, axis=-1, keepdims=True)
    xn = (xc * jax.lax.rsqrt(var + eps)) * ln1w_ref[...] + ln1b_ref[...]

    qkv = jnp.dot(xn.astype(jnp.bfloat16), wqkv_ref[...],
                  preferred_element_type=jnp.float32) + bqkv_ref[...]   # (T, 3D)
    scale = 1.0 / (hd ** 0.5)
    q = qkv[:, 0:D] * scale
    k = qkv[:, D:2 * D]
    v = qkv[:, 2 * D:3 * D]

    # head-batched attention (no per-head matmul loop, no masked scratch stores)
    qh = jnp.stack([q[:, h * hd:(h + 1) * hd] for h in range(H)],
                   axis=0).astype(jnp.bfloat16)           # (H, T, hd)
    kh = jnp.stack([k[:, h * hd:(h + 1) * hd] for h in range(H)],
                   axis=0).astype(jnp.bfloat16)
    vh = jnp.stack([v[:, h * hd:(h + 1) * hd] for h in range(H)],
                   axis=0).astype(jnp.bfloat16)
    s = jnp.einsum('hqd,hkd->hqk', qh, kh,
                   preferred_element_type=jnp.float32)    # (H, T, T)
    s = s - jnp.max(s, axis=-1, keepdims=True)
    p = jnp.exp(s)
    p = p * pl.reciprocal(jnp.sum(p, axis=-1, keepdims=True), approx=True)
    oh = jnp.einsum('hqk,hkd->hqd', p.astype(jnp.bfloat16), vh,
                    preferred_element_type=jnp.float32)   # (H, T, hd)
    attn = jnp.concatenate([oh[h] for h in range(H)], axis=-1)   # (T, D) lane-dense
    attn = jnp.dot(attn.astype(jnp.bfloat16), wo_ref[...],
                   preferred_element_type=jnp.float32) + bo_ref[...]
    x = x + attn

    # ---- feed-forward block: x + W2 relu(W1 LN2(x) + b1) + b2 ----
    mu2 = jnp.mean(x, axis=-1, keepdims=True)
    xc2 = x - mu2
    var2 = jnp.mean(xc2 * xc2, axis=-1, keepdims=True)
    xn2 = (xc2 * jax.lax.rsqrt(var2 + eps)) * ln2w_ref[...] + ln2b_ref[...]
    h1 = jnp.maximum(
        jnp.dot(xn2.astype(jnp.bfloat16), w1_ref[...],
                preferred_element_type=jnp.float32) + b1_ref[...], 0.0)
    h2 = jnp.dot(h1.astype(jnp.bfloat16), w2_ref[...],
                 preferred_element_type=jnp.float32) + b2_ref[...]
    o_ref[...] = (x + h2).astype(o_ref.dtype)


def transformer_encoder_layer(x, lp, *, B, T, H):
    M, D = x.shape
    assert M == B * T and T % 8 == 0 and D % 128 == 0 and D % H == 0
    kernel = functools.partial(_encoder_layer_kernel, H=H)
    weights = [
        lp["ln1_w"], lp["ln1_b"],
        lp["wqkv"].astype(jnp.bfloat16), lp["bqkv"],
        lp["wo"].astype(jnp.bfloat16), lp["bo"],
        lp["ln2_w"], lp["ln2_b"],
        lp["w1"].astype(jnp.bfloat16), lp["b1"],
        lp["w2"].astype(jnp.bfloat16), lp["b2"],
    ]
    in_specs = [pl.BlockSpec((T, D), lambda b: (b, 0))]
    in_specs += [pl.BlockSpec(w.shape, lambda b: (0, 0)) for w in weights]
    return pl.pallas_call(
        kernel,
        grid=(B,),
        in_specs=in_specs,
        out_specs=pl.BlockSpec((T, D), lambda b: (b, 0)),
        out_shape=jax.ShapeDtypeStruct((M, D), jnp.float32),
        compiler_params=pltpu.CompilerParams(
            dimension_semantics=("parallel",),
            vmem_limit_bytes=_VMEM_LIMIT),
    )(x, *weights)


# ----------------------------------------------------------------------------
# Tiled GEMM (accumulator scratch + pl.when) for the final bias-free Linear
# ----------------------------------------------------------------------------
def _matmul_kernel(x_ref, w_ref, o_ref, acc_ref):
    @pl.when(pl.program_id(2) == 0)
    def _():
        acc_ref[...] = jnp.zeros_like(acc_ref)

    acc_ref[...] += jnp.dot(x_ref[...].astype(jnp.bfloat16), w_ref[...],
                            preferred_element_type=jnp.float32)

    @pl.when(pl.program_id(2) == pl.num_programs(2) - 1)
    def _():
        o_ref[...] = acc_ref[...].astype(o_ref.dtype)


def _pick_tile(dim, prefs):
    for t in prefs:
        if dim % t == 0:
            return t
    return dim


def matmul_tiled(x, w):
    M, K = x.shape
    K2, N = w.shape
    assert K == K2
    tm = _pick_tile(M, (256, 128, 64, 32, 16, 8))
    tk = _pick_tile(K, (512, 256, 128))
    tn = _pick_tile(N, (512, 256, 128))
    grid = (M // tm, N // tn, K // tk)
    return pl.pallas_call(
        _matmul_kernel,
        grid=grid,
        in_specs=[
            pl.BlockSpec((tm, tk), lambda i, j, k: (i, k)),
            pl.BlockSpec((tk, tn), lambda i, j, k: (k, j)),
        ],
        out_specs=pl.BlockSpec((tm, tn), lambda i, j, k: (i, j)),
        out_shape=jax.ShapeDtypeStruct((M, N), jnp.float32),
        scratch_shapes=[pltpu.VMEM((tm, tn), jnp.float32)],
        compiler_params=pltpu.CompilerParams(
            dimension_semantics=("parallel", "parallel", "arbitrary"),
            vmem_limit_bytes=_VMEM_LIMIT),
    )(x, w.astype(jnp.bfloat16))


def linear_lane_padded(x, w, out_dim):
    """Bias-free Linear; pad output columns to a multiple of 128 for lane-dense
    stores, slice back outside the kernel."""
    K, N = w.shape
    pad = (-N) % 128
    if pad:
        w = jnp.concatenate([w, jnp.zeros((K, pad), w.dtype)], axis=1)
    out = matmul_tiled(x, w)
    return out[:, :out_dim]


# ----------------------------------------------------------------------------
# Plain-JAX glue: exact lowering of each conv layer to a banded matrix acting on
# the channel-major (NCL) flattened activation, plus eval-mode BN folding.
# ----------------------------------------------------------------------------
def _conv1d_matrix(w, L_in, padding):
    # torch Conv1d weight (Cout, Cin, K)  ->  (Cin*L_in, Cout*L_out)
    Cout, Cin, K = w.shape
    L_out = L_in + 2 * padding - K + 1
    l = np.arange(L_in)[:, None]
    t = np.arange(L_out)[None, :]
    k = l - t + padding
    valid = jnp.asarray((k >= 0) & (k < K), jnp.float32)
    kc = np.clip(k, 0, K - 1)
    g = w[:, :, kc] * valid                       # (Cout, Cin, L_in, L_out)
    mat = g.transpose(1, 2, 0, 3).reshape(Cin * L_in, Cout * L_out)
    return mat, L_out


def _convtranspose1d_matrix(w_t, L_in, stride, padding):
    # torch ConvTranspose1d weight (Cin, Cout, K)  ->  (Cin*L_in, Cout*L_out)
    Cin, Cout, K = w_t.shape
    L_out = (L_in - 1) * stride - 2 * padding + K
    i = np.arange(L_in)[:, None]
    o = np.arange(L_out)[None, :]
    k = o - i * stride + padding
    valid = jnp.asarray((k >= 0) & (k < K), jnp.float32)
    kc = np.clip(k, 0, K - 1)
    g = w_t[:, :, kc] * valid                     # (Cin, Cout, L_in, L_out)
    mat = g.transpose(0, 2, 1, 3).reshape(Cin * L_in, Cout * L_out)
    return mat, L_out


def _bn_affine(bn, L_out):
    gamma, beta, rmean, rvar = bn
    scale = gamma / jnp.sqrt(rvar + 1e-5)
    shift = beta - rmean * scale
    return (jnp.repeat(scale, L_out).reshape(1, -1),
            jnp.repeat(shift, L_out).reshape(1, -1))


def _prepare_conv_operands(params, input_size, dim):
    L = input_size
    m1, L1 = _convtranspose1d_matrix(params["ct1_w"], L, stride=2, padding=1)
    s1, b1 = _bn_affine(params["bn1"], L1)
    m2, L2 = _convtranspose1d_matrix(params["ct2_w"], L1, stride=1, padding=2)
    s2, b2 = _bn_affine(params["bn2"], L2)
    m3, L3 = _conv1d_matrix(params["cb1_w"], L2, padding=2)
    s3, b3 = _bn_affine(params["bn3"], L3)
    m4, L4 = _conv1d_matrix(params["cb2_w"], L3, padding=2)
    s4, b4 = _bn_affine(params["bn4"], L4)
    assert dim * L4 == 2 * dim * input_size
    mats = [m.astype(jnp.bfloat16) for m in (m1, m2, m3, m4)]
    return mats, [s1, s2, s3, s4], [b1, b2, b3, b4]


def conv_transformer_forward(y, params, *, input_size, dim, heads, ff_dim):
    B, T, L = y.shape
    assert L == input_size
    N = B * T

    mats, scales, shifts = _prepare_conv_operands(params, input_size, dim)

    # y.reshape(-1, 1, input_size): single channel, so channel-major flatten == (N, L)
    x = conv_frontend(y.reshape(N, L).astype(jnp.float32), mats, scales, shifts)

    # transformer encoder (pre-LN, dropout=0), tokens grouped per batch element
    for lp in params["layers"]:
        x = transformer_encoder_layer(x, lp, B=B, T=T, H=heads)

    # fc: Linear(D, ff_dim, bias=False), lane-padded output
    out = linear_lane_padded(x, params["fc_w"], ff_dim)
    return out.reshape(B, T, ff_dim)


# ----------------------------------------------------------------------------
# Deterministic synthetic parameter initialization (PyTorch weight layouts)
# ----------------------------------------------------------------------------
def init_params(key, input_size, dim, n_layers, ff_dim):
    D = 2 * dim * input_size
    half = dim // 2
    keys = jax.random.split(key, 64)
    it = iter(keys)

    def nrm(shape, s=0.1):
        return jax.random.normal(next(it), shape, jnp.float32) * s

    def bn_params(c):
        gamma = 1.0 + nrm((c,))
        beta = nrm((c,))
        rmean = nrm((c,))
        rvar = jnp.abs(nrm((c,))) + 1.0
        return (gamma, beta, rmean, rvar)

    p = {}
    p["ct1_w"] = nrm((1, half, 4))       # ConvTranspose1d weight (Cin, Cout, K)
    p["ct2_w"] = nrm((half, half, 5))
    p["cb1_w"] = nrm((dim, half, 5))     # Conv1d weight (Cout, Cin, K)
    p["cb2_w"] = nrm((dim, dim, 5))
    p["bn1"], p["bn2"] = bn_params(half), bn_params(half)
    p["bn3"], p["bn4"] = bn_params(dim), bn_params(dim)

    layers = []
    for _ in range(n_layers):
        layers.append({
            "ln1_w": 1.0 + nrm((1, D)), "ln1_b": nrm((1, D)),
            "wqkv": nrm((D, 3 * D)),    "bqkv": nrm((1, 3 * D)),
            "wo": nrm((D, D)),          "bo": nrm((1, D)),
            "ln2_w": 1.0 + nrm((1, D)), "ln2_b": nrm((1, D)),
            "w1": nrm((D, ff_dim)),     "b1": nrm((1, ff_dim)),
            "w2": nrm((ff_dim, D)),     "b2": nrm((1, D)),
        })
    p["layers"] = layers
    p["fc_w"] = nrm((D, ff_dim))         # torch Linear(D, ff_dim).weight transposed
    return p


# ----------------------------------------------------------------------------
if __name__ == "__main__":
    # ConvTRANSFORMER(input_size=16, dim=4, heads=2, n_layers=2, ff_dim=32, n_classes=10)
    # NOTE: the module's forward output width is ff_dim (self.n_classes = ff_dim).
    input_size, dim, heads, n_layers, ff_dim = 16, 4, 2, 2, 32
    B, T = 2, 8  # batch, transmission_length

    key = jax.random.PRNGKey(0)
    kp, kx = jax.random.split(key)
    params = init_params(kp, input_size, dim, n_layers, ff_dim)
    y = jax.random.normal(kx, (B, T, input_size), jnp.float32)

    fwd = jax.jit(functools.partial(
        conv_transformer_forward,
        input_size=input_size, dim=dim, heads=heads, ff_dim=ff_dim))

    out = fwd(y, params)
    out = jax.block_until_ready(out)
    assert out.shape == (B, T, ff_dim), out.shape
    assert bool(jnp.all(jnp.isfinite(out)))
    print("KERNEL_OK")
</pallas_src>

<mosaic_0001>
module attributes {stable_mosaic.version = 11 : i64} {
  func.func @_conv_frontend_kernel(%arg0: i32, %arg1: memref<8x16xf32, #tpu.memory_space<vmem>>, %arg2: memref<16x64xbf16, #tpu.memory_space<vmem>>, %arg3: memref<1x64xf32, #tpu.memory_space<vmem>>, %arg4: memref<1x64xf32, #tpu.memory_space<vmem>>, %arg5: memref<64x64xbf16, #tpu.memory_space<vmem>>, %arg6: memref<1x64xf32, #tpu.memory_space<vmem>>, %arg7: memref<1x64xf32, #tpu.memory_space<vmem>>, %arg8: memref<64x128xbf16, #tpu.memory_space<vmem>>, %arg9: memref<1x128xf32, #tpu.memory_space<vmem>>, %arg10: memref<1x128xf32, #tpu.memory_space<vmem>>, %arg11: memref<128x128xbf16, #tpu.memory_space<vmem>>, %arg12: memref<1x128xf32, #tpu.memory_space<vmem>>, %arg13: memref<1x128xf32, #tpu.memory_space<vmem>>, %arg14: memref<8x128xf32, #tpu.memory_space<vmem>>) attributes {dimension_semantics = [#tpu.dimension_semantics<parallel>], iteration_bounds = array<i64: 2>, scalar_prefetch = 0 : i64, scratch_operands = 0 : i64, tpu.core_type = #tpu.core_type<tc>, window_params = [{transform_indices = @transform_0, window_bounds = array<i64: 8, 16>}, {pipeline_mode = #tpu.pipeline_mode<synchronous>, transform_indices = @transform_1, window_bounds = array<i64: 16, 64>}, {pipeline_mode = #tpu.pipeline_mode<synchronous>, transform_indices = @transform_2, window_bounds = array<i64: 1, 64>}, {pipeline_mode = #tpu.pipeline_mode<synchronous>, transform_indices = @transform_3, window_bounds = array<i64: 1, 64>}, {pipeline_mode = #tpu.pipeline_mode<synchronous>, transform_indices = @transform_4, window_bounds = array<i64: 64, 64>}, {pipeline_mode = #tpu.pipeline_mode<synchronous>, transform_indices = @transform_5, window_bounds = array<i64: 1, 64>}, {pipeline_mode = #tpu.pipeline_mode<synchronous>, transform_indices = @transform_6, window_bounds = array<i64: 1, 64>}, {pipeline_mode = #tpu.pipeline_mode<synchronous>, transform_indices = @transform_7, window_bounds = array<i64: 64, 128>}, {pipeline_mode = #tpu.pipeline_mode<synchronous>, transform_indices = @transform_8, window_bounds = array<i64: 1, 128>}, {pipeline_mode = #tpu.pipeline_mode<synchronous>, transform_indices = @transform_9, window_bounds = array<i64: 1, 128>}, {pipeline_mode = #tpu.pipeline_mode<synchronous>, transform_indices = @transform_10, window_bounds = array<i64: 128, 128>}, {pipeline_mode = #tpu.pipeline_mode<synchronous>, transform_indices = @transform_11, window_bounds = array<i64: 1, 128>}, {pipeline_mode = #tpu.pipeline_mode<synchronous>, transform_indices = @transform_12, window_bounds = array<i64: 1, 128>}, {transform_indices = @transform_13, window_bounds = array<i64: 8, 128>}]} {
    %c0 = arith.constant 0 : index
    %c0_0 = arith.constant 0 : index
    %0 = vector.load %arg1[%c0, %c0_0] : memref<8x16xf32, #tpu.memory_space<vmem>>, vector<8x16xf32>
    %1 = arith.truncf %0 : vector<8x16xf32> to vector<8x16xbf16>
    %c0_1 = arith.constant 0 : index
    %c0_2 = arith.constant 0 : index
    %2 = vector.load %arg2[%c0_1, %c0_2] : memref<16x64xbf16, #tpu.memory_space<vmem>>, vector<16x64xbf16>
    %cst = arith.constant dense<0.000000e+00> : vector<8x64xf32>
    %3 = tpu.matmul %1, %2, %cst {dimension_numbers = #tpu.dot_dimension_numbers<[1], [0], [0], [1], [0, 0, 1, 1], [], []>} : vector<8x16xbf16>, vector<16x64xbf16>, vector<8x64xf32> -> vector<8x64xf32>
    %cst_3 = arith.constant 5.000000e-01 : f32
    %4 = vector.broadcast %cst_3 : f32 to vector<8x64xf32>
    %5 = arith.mulf %4, %3 : vector<8x64xf32>
    %6 = math.tanh %5 : vector<8x64xf32>
    %cst_4 = arith.constant 1.000000e+00 : f32
    %7 = vector.broadcast %cst_4 : f32 to vector<8x64xf32>
    %8 = arith.addf %6, %7 : vector<8x64xf32>
    %cst_5 = arith.constant 5.000000e-01 : f32
    %9 = vector.broadcast %cst_5 : f32 to vector<8x64xf32>
    %10 = arith.mulf %9, %8 : vector<8x64xf32>
    %c0_6 = arith.constant 0 : index
    %c0_7 = arith.constant 0 : index
    %11 = vector.load %arg3[%c0_6, %c0_7] : memref<1x64xf32, #tpu.memory_space<vmem>>, vector<1x64xf32>
    %12 = vector.broadcast %11 : vector<1x64xf32> to vector<8x64xf32>
    %13 = arith.mulf %10, %12 : vector<8x64xf32>
    %c0_8 = arith.constant 0 : index
    %c0_9 = arith.constant 0 : index
    %14 = vector.load %arg4[%c0_8, %c0_9] : memref<1x64xf32, #tpu.memory_space<vmem>>, vector<1x64xf32>
    %15 = vector.broadcast %14 : vector<1x64xf32> to vector<8x64xf32>
    %16 = arith.addf %13, %15 : vector<8x64xf32>
    %17 = arith.truncf %16 : vector<8x64xf32> to vector<8x64xbf16>
    %c0_10 = arith.constant 0 : index
    %c0_11 = arith.constant 0 : index
    %18 = vector.load %arg5[%c0_10, %c0_11] : memref<64x64xbf16, #tpu.memory_space<vmem>>, vector<64x64xbf16>
    %cst_12 = arith.constant dense<0.000000e+00> : vector<8x64xf32>
    %19 = tpu.matmul %17, %18, %cst_12 {dimension_numbers = #tpu.dot_dimension_numbers<[1], [0], [0], [1], [0, 0, 1, 1], [], []>} : vector<8x64xbf16>, vector<64x64xbf16>, vector<8x64xf32> -> vector<8x64xf32>
    %cst_13 = arith.constant 0.000000e+00 : f32
    %20 = vector.broadcast %cst_13 : f32 to vector<8x64xf32>
    %21 = arith.maximumf %19, %20 : vector<8x64xf32>
    %c0_14 = arith.constant 0 : index
    %c0_15 = arith.constant 0 : index
    %22 = vector.load %arg6[%c0_14, %c0_15] : memref<1x64xf32, #tpu.memory_space<vmem>>, vector<1x64xf32>
    %23 = vector.broadcast %22 : vector<1x64xf32> to vector<8x64xf32>
    %24 = arith.mulf %21, %23 : vector<8x64xf32>
    %c0_16 = arith.constant 0 : index
    %c0_17 = arith.constant 0 : index
    %25 = vector.load %arg7[%c0_16, %c0_17] : memref<1x64xf32, #tpu.memory_space<vmem>>, vector<1x64xf32>
    %26 = vector.broadcast %25 : vector<1x64xf32> to vector<8x64xf32>
    %27 = arith.addf %24, %26 : vector<8x64xf32>
    %28 = arith.truncf %27 : vector<8x64xf32> to vector<8x64xbf16>
    %c0_18 = arith.constant 0 : index
    %c0_19 = arith.constant 0 : index
    %29 = vector.load %arg8[%c0_18, %c0_19] : memref<64x128xbf16, #tpu.memory_space<vmem>>, vector<64x128xbf16>
    %cst_20 = arith.constant dense<0.000000e+00> : vector<8x128xf32>
    %30 = tpu.matmul %28, %29, %cst_20 {dimension_numbers = #tpu.dot_dimension_numbers<[1], [0], [0], [1], [0, 0, 1, 1], [], []>} : vector<8x64xbf16>, vector<64x128xbf16>, vector<8x128xf32> -> vector<8x128xf32>
    %c0_21 = arith.constant 0 : index
    %c0_22 = arith.constant 0 : index
    %31 = vector.load %arg9[%c0_21, %c0_22] : memref<1x128xf32, #tpu.memory_space<vmem>>, vector<1x128xf32>
    %32 = vector.broadcast %31 : vector<1x128xf32> to vector<8x128xf32>
    %33 = arith.mulf %30, %32 : vector<8x128xf32>
    %c0_23 = arith.constant 0 : index
    %c0_24 = arith.constant 0 : index
    %34 = vector.load %arg10[%c0_23, %c0_24] : memref<1x128xf32, #tpu.memory_space<vmem>>, vector<1x128xf32>
    %35 = vector.broadcast %34 : vector<1x128xf32> to vector<8x128xf32>
    %36 = arith.addf %33, %35 : vector<8x128xf32>
    %cst_25 = arith.constant 0.000000e+00 : f32
    %37 = vector.broadcast %cst_25 : f32 to vector<8x128xf32>
    %38 = arith.maximumf %36, %37 : vector<8x128xf32>
    %39 = arith.truncf %38 : vector<8x128xf32> to vector<8x128xbf16>
    %c0_26 = arith.constant 0 : index
    %c0_27 = arith.constant 0 : index
    %40 = vector.load %arg11[%c0_26, %c0_27] : memref<128x128xbf16, #tpu.memory_space<vmem>>, vector<128x128xbf16>
    %cst_28 = arith.constant dense<0.000000e+00> : vector<8x128xf32>
    %41 = tpu.matmul %39, %40, %cst_28 {dimension_numbers = #tpu.dot_dimension_numbers<[1], [0], [0], [1], [0, 0, 1, 1], [], []>} : vector<8x128xbf16>, vector<128x128xbf16>, vector<8x128xf32> -> vector<8x128xf32>
    %c0_29 = arith.constant 0 : index
    %c0_30 = arith.constant 0 : index
    %42 = vector.load %arg12[%c0_29, %c0_30] : memref<1x128xf32, #tpu.memory_space<vmem>>, vector<1x128xf32>
    %43 = vector.broadcast %42 : vector<1x128xf32> to vector<8x128xf32>
    %44 = arith.mulf %41, %43 : vector<8x128xf32>
    %c0_31 = arith.constant 0 : index
    %c0_32 = arith.constant 0 : index
    %45 = vector.load %arg13[%c0_31, %c0_32] : memref<1x128xf32, #tpu.memory_space<vmem>>, vector<1x128xf32>
    %46 = vector.broadcast %45 : vector<1x128xf32> to vector<8x128xf32>
    %47 = arith.addf %44, %46 : vector<8x128xf32>
    %cst_33 = arith.constant 0.000000e+00 : f32
    %48 = vector.broadcast %cst_33 : f32 to vector<8x128xf32>
    %49 = arith.maximumf %47, %48 : vector<8x128xf32>
    %c0_34 = arith.constant 0 : index
    %c0_35 = arith.constant 0 : index
    %50 = vector.load %arg14[%c0_34, %c0_35] : memref<8x128xf32, #tpu.memory_space<vmem>>, vector<8x128xf32>
    tpu.vector_store %arg14[%c0_34, %c0_35], %49 {strides = array<i32>} : memref<8x128xf32, #tpu.memory_space<vmem>>, vector<8x128xf32>,
    return
  }
  func.func @transform_0(%arg0: i32) -> (i32, i32) {
    %c0_i32 = arith.constant 0 : i32
    %c0_i32_0 = arith.constant 0 : i32
    return %arg0, %c0_i32 : i32, i32
  }
  func.func @transform_1(%arg0: i32) -> (i32, i32) {
    %c0_i32 = arith.constant 0 : i32
    %c0_i32_0 = arith.constant 0 : i32
    %c0_i32_1 = arith.constant 0 : i32
    return %c0_i32, %c0_i32_0 : i32, i32
  }
  func.func @transform_2(%arg0: i32) -> (i32, i32) {
    %c0_i32 = arith.constant 0 : i32
    %c0_i32_0 = arith.constant 0 : i32
    %c0_i32_1 = arith.constant 0 : i32
    return %c0_i32, %c0_i32_0 : i32, i32
  }
  func.func @transform_3(%arg0: i32) -> (i32, i32) {
    %c0_i32 = arith.constant 0 : i32
    %c0_i32_0 = arith.constant 0 : i32
    %c0_i32_1 = arith.constant 0 : i32
    return %c0_i32, %c0_i32_0 : i32, i32
  }
  func.func @transform_4(%arg0: i32) -> (i32, i32) {
    %c0_i32 = arith.constant 0 : i32
    %c0_i32_0 = arith.constant 0 : i32
    %c0_i32_1 = arith.constant 0 : i32
    return %c0_i32, %c0_i32_0 : i32, i32
  }
  func.func @transform_5(%arg0: i32) -> (i32, i32) {
    %c0_i32 = arith.constant 0 : i32
    %c0_i32_0 = arith.constant 0 : i32
    %c0_i32_1 = arith.constant 0 : i32
    return %c0_i32, %c0_i32_0 : i32, i32
  }
  func.func @transform_6(%arg0: i32) -> (i32, i32) {
    %c0_i32 = arith.constant 0 : i32
    %c0_i32_0 = arith.constant 0 : i32
    %c0_i32_1 = arith.constant 0 : i32
    return %c0_i32, %c0_i32_0 : i32, i32
  }
  func.func @transform_7(%arg0: i32) -> (i32, i32) {
    %c0_i32 = arith.constant 0 : i32
    %c0_i32_0 = arith.constant 0 : i32
    %c0_i32_1 = arith.constant 0 : i32
    return %c0_i32, %c0_i32_0 : i32, i32
  }
  func.func @transform_8(%arg0: i32) -> (i32, i32) {
    %c0_i32 = arith.constant 0 : i32
    %c0_i32_0 = arith.constant 0 : i32
    %c0_i32_1 = arith.constant 0 : i32
    return %c0_i32, %c0_i32_0 : i32, i32
  }
  func.func @transform_9(%arg0: i32) -> (i32, i32) {
    %c0_i32 = arith.constant 0 : i32
    %c0_i32_0 = arith.constant 0 : i32
    %c0_i32_1 = arith.constant 0 : i32
    return %c0_i32, %c0_i32_0 : i32, i32
  }
  func.func @transform_10(%arg0: i32) -> (i32, i32) {
    %c0_i32 = arith.constant 0 : i32
    %c0_i32_0 = arith.constant 0 : i32
    %c0_i32_1 = arith.constant 0 : i32
    return %c0_i32, %c0_i32_0 : i32, i32
  }
  func.func @transform_11(%arg0: i32) -> (i32, i32) {
    %c0_i32 = arith.constant 0 : i32
    %c0_i32_0 = arith.constant 0 : i32
    %c0_i32_1 = arith.constant 0 : i32
    return %c0_i32, %c0_i32_0 : i32, i32
  }
  func.func @transform_12(%arg0: i32) -> (i32, i32) {
    %c0_i32 = arith.constant 0 : i32
    %c0_i32_0 = arith.constant 0 : i32
    %c0_i32_1 = arith.constant 0 : i32
    return %c0_i32, %c0_i32_0 : i32, i32
  }
  func.func @transform_13(%arg0: i32) -> (i32, i32) {
    %c0_i32 = arith.constant 0 : i32
    %c0_i32_0 = arith.constant 0 : i32
    return %arg0, %c0_i32 : i32, i32
  }
}

module attributes {stable_mosaic.version = 11 : i64} {
  func.func @_encoder_layer_kernel(%arg0: i32, %arg1: memref<8x128xf32, #tpu.memory_space<vmem>>, %arg2: memref<1x128xf32, #tpu.memory_space<vmem>>, %arg3: memref<1x128xf32, #tpu.memory_space<vmem>>, %arg4: memref<128x384xbf16, #tpu.memory_space<vmem>>, %arg5: memref<1x384xf32, #tpu.memory_space<vmem>>, %arg6: memref<128x128xbf16, #tpu.memory_space<vmem>>, %arg7: memref<1x128xf32, #tpu.memory_space<vmem>>, %arg8: memref<1x128xf32, #tpu.memory_space<vmem>>, %arg9: memref<1x128xf32, #tpu.memory_space<vmem>>, %arg10: memref<128x32xbf16, #tpu.memory_space<vmem>>, %arg11: memref<1x32xf32, #tpu.memory_space<vmem>>, %arg12: memref<32x128xbf16, #tpu.memory_space<vmem>>, %arg13: memref<1x128xf32, #tpu.memory_space<vmem>>, %arg14: memref<8x128xf32, #tpu.memory_space<vmem>>) attributes {dimension_semantics = [#tpu.dimension_semantics<parallel>], iteration_bounds = array<i64: 2>, scalar_prefetch = 0 : i64, scratch_operands = 0 : i64, tpu.core_type = #tpu.core_type<tc>, window_params = [{transform_indices = @transform_0, window_bounds = array<i64: 8, 128>}, {pipeline_mode = #tpu.pipeline_mode<synchronous>, transform_indices = @transform_1, window_bounds = array<i64: 1, 128>}, {pipeline_mode = #tpu.pipeline_mode<synchronous>, transform_indices = @transform_2, window_bounds = array<i64: 1, 128>}, {pipeline_mode = #tpu.pipeline_mode<synchronous>, transform_indices = @transform_3, window_bounds = array<i64: 128, 384>}, {pipeline_mode = #tpu.pipeline_mode<synchronous>, transform_indices = @transform_4, window_bounds = array<i64: 1, 384>}, {pipeline_mode = #tpu.pipeline_mode<synchronous>, transform_indices = @transform_5, window_bounds = array<i64: 128, 128>}, {pipeline_mode = #tpu.pipeline_mode<synchronous>, transform_indices = @transform_6, window_bounds = array<i64: 1, 128>}, {pipeline_mode = #tpu.pipeline_mode<synchronous>, transform_indices = @transform_7, window_bounds = array<i64: 1, 128>}, {pipeline_mode = #tpu.pipeline_mode<synchronous>, transform_indices = @transform_8, window_bounds = array<i64: 1, 128>}, {pipeline_mode = #tpu.pipeline_mode<synchronous>, transform_indices = @transform_9, window_bounds = array<i64: 128, 32>}, {pipeline_mode = #tpu.pipeline_mode<synchronous>, transform_indices = @transform_10, window_bounds = array<i64: 1, 32>}, {pipeline_mode = #tpu.pipeline_mode<synchronous>, transform_indices = @transform_11, window_bounds = array<i64: 32, 128>}, {pipeline_mode = #tpu.pipeline_mode<synchronous>, transform_indices = @transform_12, window_bounds = array<i64: 1, 128>}, {transform_indices = @transform_13, window_bounds = array<i64: 8, 128>}]} {
    %c0 = arith.constant 0 : index
    %c0_0 = arith.constant 0 : index
    %0 = vector.load %arg1[%c0, %c0_0] : memref<8x128xf32, #tpu.memory_space<vmem>>, vector<8x128xf32>
    %cst = arith.constant dense<0.000000e+00> : vector<8xf32>
    %1 = vector.multi_reduction <add>, %0, %cst [1] : vector<8x128xf32> to vector<8xf32>
    %2 = vector.shape_cast %1 : vector<8xf32> to vector<8x1xf32>
    %cst_1 = arith.constant 1.280000e+02 : f32
    %3 = vector.broadcast %cst_1 : f32 to vector<8x1xf32>
    %4 = arith.divf %2, %3 : vector<8x1xf32>
    %5 = vector.broadcast %4 : vector<8x1xf32> to vector<8x128xf32>
    %6 = arith.subf %0, %5 : vector<8x128xf32>
    %7 = arith.mulf %6, %6 : vector<8x128xf32>
    %cst_2 = arith.constant dense<0.000000e+00> : vector<8xf32>
    %8 = vector.multi_reduction <add>, %7, %cst_2 [1] : vector<8x128xf32> to vector<8xf32>
    %9 = vector.shape_cast %8 : vector<8xf32> to vector<8x1xf32>
    %cst_3 = arith.constant 1.280000e+02 : f32
    %10 = vector.broadcast %cst_3 : f32 to vector<8x1xf32>
    %11 = arith.divf %9, %10 : vector<8x1xf32>
    %cst_4 = arith.constant 9.99999974E-6 : f32
    %12 = vector.broadcast %cst_4 : f32 to vector<8x1xf32>
    %13 = arith.addf %11, %12 : vector<8x1xf32>
    %14 = math.rsqrt %13 : vector<8x1xf32>
    %15 = vector.broadcast %14 : vector<8x1xf32> to vector<8x128xf32>
    %16 = arith.mulf %6, %15 : vector<8x128xf32>
    %c0_5 = arith.constant 0 : index
    %c0_6 = arith.constant 0 : index
    %17 = vector.load %arg2[%c0_5, %c0_6] : memref<1x128xf32, #tpu.memory_space<vmem>>, vector<1x128xf32>
    %18 = vector.broadcast %17 : vector<1x128xf32> to vector<8x128xf32>
    %19 = arith.mulf %16, %18 : vector<8x128xf32>
    %c0_7 = arith.constant 0 : index
    %c0_8 = arith.constant 0 : index
    %20 = vector.load %arg3[%c0_7, %c0_8] : memref<1x128xf32, #tpu.memory_space<vmem>>, vector<1x128xf32>
    %21 = vector.broadcast %20 : vector<1x128xf32> to vector<8x128xf32>
    %22 = arith.addf %19, %21 : vector<8x128xf32>
    %23 = arith.truncf %22 : vector<8x128xf32> to vector<8x128xbf16>
    %c0_9 = arith.constant 0 : index
    %c0_10 = arith.constant 0 : index
    %24 = vector.load %arg4[%c0_9, %c0_10] : memref<128x384xbf16, #tpu.memory_space<vmem>>, vector<128x384xbf16>
    %cst_11 = arith.constant dense<0.000000e+00> : vector<8x384xf32>
    %25 = tpu.matmul %23, %24, %cst_11 {dimension_numbers = #tpu.dot_dimension_numbers<[1], [0], [0], [1], [0, 0, 1, 1], [], []>} : vector<8x128xbf16>, vector<128x384xbf16>, vector<8x384xf32> -> vector<8x384xf32>
    %c0_12 = arith.constant 0 : index
    %c0_13 = arith.constant 0 : index
    %26 = vector.load %arg5[%c0_12, %c0_13] : memref<1x384xf32, #tpu.memory_space<vmem>>, vector<1x384xf32>
    %27 = vector.broadcast %26 : vector<1x384xf32> to vector<8x384xf32>
    %28 = arith.addf %25, %27 : vector<8x384xf32>
    %29 = vector.extract_strided_slice %28 {offsets = [0, 0], sizes = [8, 128], strides = [1, 1]} : vector<8x384xf32> to vector<8x128xf32>
    %cst_14 = arith.constant 1.250000e-01 : f32
    %30 = vector.broadcast %cst_14 : f32 to vector<8x128xf32>
    %31 = arith.mulf %29, %30 : vector<8x128xf32>
    %32 = vector.extract_strided_slice %28 {offsets = [0, 128], sizes = [8, 128], strides = [1, 1]} : vector<8x384xf32> to vector<8x128xf32>
    %33 = vector.extract_strided_slice %28 {offsets = [0, 256], sizes = [8, 128], strides = [1, 1]} : vector<8x384xf32> to vector<8x128xf32>
    %34 = vector.extract_strided_slice %31 {offsets = [0, 0], sizes = [8, 64], strides = [1, 1]} : vector<8x128xf32> to vector<8x64xf32>
    %35 = vector.extract_strided_slice %31 {offsets = [0, 64], sizes = [8, 64], strides = [1, 1]} : vector<8x128xf32> to vector<8x64xf32>
    %36 = vector.shape_cast %34 : vector<8x64xf32> to vector<1x8x64xf32>
    %37 = vector.shape_cast %35 : vector<8x64xf32> to vector<1x8x64xf32>
    %38 = tpu.concatenate %36, %37 in 0 : vector<1x8x64xf32>, vector<1x8x64xf32> -> vector<2x8x64xf32>
    %39 = arith.truncf %38 : vector<2x8x64xf32> to vector<2x8x64xbf16>
    %40 = vector.extract_strided_slice %32 {offsets = [0, 0], sizes = [8, 64], strides = [1, 1]} : vector<8x128xf32> to vector<8x64xf32>
    %41 = vector.extract_strided_slice %32 {offsets = [0, 64], sizes = [8, 64], strides = [1, 1]} : vector<8x128xf32> to vector<8x64xf32>
    %42 = vector.shape_cast %40 : vector<8x64xf32> to vector<1x8x64xf32>
    %43 = vector.shape_cast %41 : vector<8x64xf32> to vector<1x8x64xf32>
    %44 = tpu.concatenate %42, %43 in 0 : vector<1x8x64xf32>, vector<1x8x64xf32> -> vector<2x8x64xf32>
    %45 = arith.truncf %44 : vector<2x8x64xf32> to vector<2x8x64xbf16>
    %46 = vector.extract_strided_slice %33 {offsets = [0, 0], sizes = [8, 64], strides = [1, 1]} : vector<8x128xf32> to vector<8x64xf32>
    %47 = vector.extract_strided_slice %33 {offsets = [0, 64], sizes = [8, 64], strides = [1, 1]} : vector<8x128xf32> to vector<8x64xf32>
    %48 = vector.shape_cast %46 : vector<8x64xf32> to vector<1x8x64xf32>
    %49 = vector.shape_cast %47 : vector<8x64xf32> to vector<1x8x64xf32>
    %50 = tpu.concatenate %48, %49 in 0 : vector<1x8x64xf32>, vector<1x8x64xf32> -> vector<2x8x64xf32>
    %51 = arith.truncf %50 : vector<2x8x64xf32> to vector<2x8x64xbf16>
    "tpu.trace_start"() <{level = 10 : i32, message = "hqd,hkd->hqk"}> : () -> ()
    %cst_15 = arith.constant dense<0.000000e+00> : vector<2x8x8xf32>
    %52 = tpu.matmul %39, %45, %cst_15 {dimension_numbers = #tpu.dot_dimension_numbers<[2], [2], [1], [1], [0, 0, 0, 1, 1, 1], [0], [0]>} : vector<2x8x64xbf16>, vector<2x8x64xbf16>, vector<2x8x8xf32> -> vector<2x8x8xf32>
    "tpu.trace_stop"() : () -> ()
    %cst_16 = arith.constant dense<0xFF800000> : vector<2x8xf32>
    %53 = vector.multi_reduction <maximumf>, %52, %cst_16 [2] : vector<2x8x8xf32> to vector<2x8xf32>
    %54 = vector.shape_cast %53 : vector<2x8xf32> to vector<2x8x1xf32>
    %55 = vector.broadcast %54 : vector<2x8x1xf32> to vector<2x8x8xf32>
    %56 = arith.subf %52, %55 : vector<2x8x8xf32>
    %57 = math.exp %56 : vector<2x8x8xf32>
    %cst_17 = arith.constant dense<0.000000e+00> : vector<2x8xf32>
    %58 = vector.multi_reduction <add>, %57, %cst_17 [2] : vector<2x8x8xf32> to vector<2x8xf32>
    %59 = vector.shape_cast %58 : vector<2x8xf32> to vector<2x8x1xf32>
    %60 = tpu.reciprocal %59 {approx = true} : vector<2x8x1xf32> -> vector<2x8x1xf32>
    %61 = vector.broadcast %60 : vector<2x8x1xf32> to vector<2x8x8xf32>
    %62 = arith.mulf %57, %61 : vector<2x8x8xf32>
    %63 = arith.truncf %62 : vector<2x8x8xf32> to vector<2x8x8xbf16>
    "tpu.trace_start"() <{level = 10 : i32, message = "hqk,hkd->hqd"}> : () -> ()
    %cst_18 = arith.constant dense<0.000000e+00> : vector<2x8x64xf32>
    %64 = tpu.matmul %63, %51, %cst_18 {dimension_numbers = #tpu.dot_dimension_numbers<[2], [1], [1], [2], [0, 0, 0, 1, 1, 2], [0], [0]>} : vector<2x8x8xbf16>, vector<2x8x64xbf16>, vector<2x8x64xf32> -> vector<2x8x64xf32>
    "tpu.trace_stop"() : () -> ()
    %65 = vector.extract_strided_slice %64 {offsets = [0, 0, 0], sizes = [1, 8, 64], strides = [1, 1, 1]} : vector<2x8x64xf32> to vector<1x8x64xf32>
    %66 = vector.shape_cast %65 : vector<1x8x64xf32> to vector<8x64xf32>
    %67 = vector.extract_strided_slice %64 {offsets = [1, 0, 0], sizes = [1, 8, 64], strides = [1, 1, 1]} : vector<2x8x64xf32> to vector<1x8x64xf32>
    %68 = vector.shape_cast %67 : vector<1x8x64xf32> to vector<8x64xf32>
    %69 = tpu.concatenate %66, %68 in 1 : vector<8x64xf32>, vector<8x64xf32> -> vector<8x128xf32>
    %70 = arith.truncf %69 : vector<8x128xf32> to vector<8x128xbf16>
    %c0_19 = arith.constant 0 : index
    %c0_20 = arith.constant 0 : index
    %71 = vector.load %arg6[%c0_19, %c0_20] : memref<128x128xbf16, #tpu.memory_space<vmem>>, vector<128x128xbf16>
    %cst_21 = arith.constant dense<0.000000e+00> : vector<8x128xf32>
    %72 = tpu.matmul %70, %71, %cst_21 {dimension_numbers = #tpu.dot_dimension_numbers<[1], [0], [0], [1], [0, 0, 1, 1], [], []>} : vector<8x128xbf16>, vector<128x128xbf16>, vector<8x128xf32> -> vector<8x128xf32>
    %c0_22 = arith.constant 0 : index
    %c0_23 = arith.constant 0 : index
    %73 = vector.load %arg7[%c0_22, %c0_23] : memref<1x128xf32, #tpu.memory_space<vmem>>, vector<1x128xf32>
    %74 = vector.broadcast %73 : vector<1x128xf32> to vector<8x128xf32>
    %75 = arith.addf %72, %74 : vector<8x128xf32>
    %76 = arith.addf %0, %75 : vector<8x128xf32>
    %cst_24 = arith.constant dense<0.000000e+00> : vector<8xf32>
    %77 = vector.multi_reduction <add>, %76, %cst_24 [1] : vector<8x128xf32> to vector<8xf32>
    %78 = vector.shape_cast %77 : vector<8xf32> to vector<8x1xf32>
    %cst_25 = arith.constant 1.280000e+02 : f32
    %79 = vector.broadcast %cst_25 : f32 to vector<8x1xf32>
    %80 = arith.divf %78, %79 : vector<8x1xf32>
    %81 = vector.broadcast %80 : vector<8x1xf32> to vector<8x128xf32>
    %82 = arith.subf %76, %81 : vector<8x128xf32>
    %83 = arith.mulf %82, %82 : vector<8x128xf32>
    %cst_26 = arith.constant dense<0.000000e+00> : vector<8xf32>
    %84 = vector.multi_reduction <add>, %83, %cst_26 [1] : vector<8x128xf32> to vector<8xf32>
    %85 = vector.shape_cast %84 : vector<8xf32> to vector<8x1xf32>
    %cst_27 = arith.constant 1.280000e+02 : f32
    %86 = vector.broadcast %cst_27 : f32 to vector<8x1xf32>
    %87 = arith.divf %85, %86 : vector<8x1xf32>
    %cst_28 = arith.constant 9.99999974E-6 : f32
    %88 = vector.broadcast %cst_28 : f32 to vector<8x1xf32>
    %89 = arith.addf %87, %88 : vector<8x1xf32>
    %90 = math.rsqrt %89 : vector<8x1xf32>
    %91 = vector.broadcast %90 : vector<8x1xf32> to vector<8x128xf32>
    %92 = arith.mulf %82, %91 : vector<8x128xf32>
    %c0_29 = arith.constant 0 : index
    %c0_30 = arith.constant 0 : index
    %93 = vector.load %arg8[%c0_29, %c0_30] : memref<1x128xf32, #tpu.memory_space<vmem>>, vector<1x128xf32>
    %94 = vector.broadcast %93 : vector<1x128xf32> to vector<8x128xf32>
    %95 = arith.mulf %92, %94 : vector<8x128xf32>
    %c0_31 = arith.constant 0 : index
    %c0_32 = arith.constant 0 : index
    %96 = vector.load %arg9[%c0_31, %c0_32] : memref<1x128xf32, #tpu.memory_space<vmem>>, vector<1x128xf32>
    %97 = vector.broadcast %96 : vector<1x128xf32> to vector<8x128xf32>
    %98 = arith.addf %95, %97 : vector<8x128xf32>
    %99 = arith.truncf %98 : vector<8x128xf32> to vector<8x128xbf16>
    %c0_33 = arith.constant 0 : index
    %c0_34 = arith.constant 0 : index
    %100 = vector.load %arg10[%c0_33, %c0_34] : memref<128x32xbf16, #tpu.memory_space<vmem>>, vector<128x32xbf16>
    %cst_35 = arith.constant dense<0.000000e+00> : vector<8x32xf32>
    %101 = tpu.matmul %99, %100, %cst_35 {dimension_numbers = #tpu.dot_dimension_numbers<[1], [0], [0], [1], [0, 0, 1, 1], [], []>} : vector<8x128xbf16>, vector<128x32xbf16>, vector<8x32xf32> -> vector<8x32xf32>
    %c0_36 = arith.constant 0 : index
    %c0_37 = arith.constant 0 : index
    %102 = vector.load %arg11[%c0_36, %c0_37] : memref<1x32xf32, #tpu.memory_space<vmem>>, vector<1x32xf32>
    %103 = vector.broadcast %102 : vector<1x32xf32> to vector<8x32xf32>
    %104 = arith.addf %101, %103 : vector<8x32xf32>
    %cst_38 = arith.constant 0.000000e+00 : f32
    %105 = vector.broadcast %cst_38 : f32 to vector<8x32xf32>
    %106 = arith.maximumf %104, %105 : vector<8x32xf32>
    %107 = arith.truncf %106 : vector<8x32xf32> to vector<8x32xbf16>
    %c0_39 = arith.constant 0 : index
    %c0_40 = arith.constant 0 : index
    %108 = vector.load %arg12[%c0_39, %c0_40] : memref<32x128xbf16, #tpu.memory_space<vmem>>, vector<32x128xbf16>
    %cst_41 = arith.constant dense<0.000000e+00> : vector<8x128xf32>
    %109 = tpu.matmul %107, %108, %cst_41 {dimension_numbers = #tpu.dot_dimension_numbers<[1], [0], [0], [1], [0, 0, 1, 1], [], []>} : vector<8x32xbf16>, vector<32x128xbf16>, vector<8x128xf32> -> vector<8x128xf32>
    %c0_42 = arith.constant 0 : index
    %c0_43 = arith.constant 0 : index
    %110 = vector.load %arg13[%c0_42, %c0_43] : memref<1x128xf32, #tpu.memory_space<vmem>>, vector<1x128xf32>
    %111 = vector.broadcast %110 : vector<1x128xf32> to vector<8x128xf32>
    %112 = arith.addf %109, %111 : vector<8x128xf32>
    %113 = arith.addf %76, %112 : vector<8x128xf32>
    %c0_44 = arith.constant 0 : index
    %c0_45 = arith.constant 0 : index
    %114 = vector.load %arg14[%c0_44, %c0_45] : memref<8x128xf32, #tpu.memory_space<vmem>>, vector<8x128xf32>
    tpu.vector_store %arg14[%c0_44, %c0_45], %113 {strides = array<i32>} : memref<8x128xf32, #tpu.memory_space<vmem>>, vector<8x128xf32>,
    return
  }
  func.func @transform_0(%arg0: i32) -> (i32, i32) {
    %c0_i32 = arith.constant 0 : i32
    %c0_i32_0 = arith.constant 0 : i32
    return %arg0, %c0_i32 : i32, i32
  }
  func.func @transform_1(%arg0: i32) -> (i32, i32) {
    %c0_i32 = arith.constant 0 : i32
    %c0_i32_0 = arith.constant 0 : i32
    %c0_i32_1 = arith.constant 0 : i32
    return %c0_i32, %c0_i32_0 : i32, i32
  }
  func.func @transform_2(%arg0: i32) -> (i32, i32) {
    %c0_i32 = arith.constant 0 : i32
    %c0_i32_0 = arith.constant 0 : i32
    %c0_i32_1 = arith.constant 0 : i32
    return %c0_i32, %c0_i32_0 : i32, i32
  }
  func.func @transform_3(%arg0: i32) -> (i32, i32) {
    %c0_i32 = arith.constant 0 : i32
    %c0_i32_0 = arith.constant 0 : i32
    %c0_i32_1 = arith.constant 0 : i32
    return %c0_i32, %c0_i32_0 : i32, i32
  }
  func.func @transform_4(%arg0: i32) -> (i32, i32) {
    %c0_i32 = arith.constant 0 : i32
    %c0_i32_0 = arith.constant 0 : i32
    %c0_i32_1 = arith.constant 0 : i32
    return %c0_i32, %c0_i32_0 : i32, i32
  }
  func.func @transform_5(%arg0: i32) -> (i32, i32) {
    %c0_i32 = arith.constant 0 : i32
    %c0_i32_0 = arith.constant 0 : i32
    %c0_i32_1 = arith.constant 0 : i32
    return %c0_i32, %c0_i32_0 : i32, i32
  }
  func.func @transform_6(%arg0: i32) -> (i32, i32) {
    %c0_i32 = arith.constant 0 : i32
    %c0_i32_0 = arith.constant 0 : i32
    %c0_i32_1 = arith.constant 0 : i32
    return %c0_i32, %c0_i32_0 : i32, i32
  }
  func.func @transform_7(%arg0: i32) -> (i32, i32) {
    %c0_i32 = arith.constant 0 : i32
    %c0_i32_0 = arith.constant 0 : i32
    %c0_i32_1 = arith.constant 0 : i32
    return %c0_i32, %c0_i32_0 : i32, i32
  }
  func.func @transform_8(%arg0: i32) -> (i32, i32) {
    %c0_i32 = arith.constant 0 : i32
    %c0_i32_0 = arith.constant 0 : i32
    %c0_i32_1 = arith.constant 0 : i32
    return %c0_i32, %c0_i32_0 : i32, i32
  }
  func.func @transform_9(%arg0: i32) -> (i32, i32) {
    %c0_i32 = arith.constant 0 : i32
    %c0_i32_0 = arith.constant 0 : i32
    %c0_i32_1 = arith.constant 0 : i32
    return %c0_i32, %c0_i32_0 : i32, i32
  }
  func.func @transform_10(%arg0: i32) -> (i32, i32) {
    %c0_i32 = arith.constant 0 : i32
    %c0_i32_0 = arith.constant 0 : i32
    %c0_i32_1 = arith.constant 0 : i32
    return %c0_i32, %c0_i32_0 : i32, i32
  }
  func.func @transform_11(%arg0: i32) -> (i32, i32) {
    %c0_i32 = arith.constant 0 : i32
    %c0_i32_0 = arith.constant 0 : i32
    %c0_i32_1 = arith.constant 0 : i32
    return %c0_i32, %c0_i32_0 : i32, i32
  }
  func.func @transform_12(%arg0: i32) -> (i32, i32) {
    %c0_i32 = arith.constant 0 : i32
    %c0_i32_0 = arith.constant 0 : i32
    %c0_i32_1 = arith.constant 0 : i32
    return %c0_i32, %c0_i32_0 : i32, i32
  }
  func.func @transform_13(%arg0: i32) -> (i32, i32) {
    %c0_i32 = arith.constant 0 : i32
    %c0_i32_0 = arith.constant 0 : i32
    return %arg0, %c0_i32 : i32, i32
  }
}

module attributes {stable_mosaic.version = 11 : i64} {
  func.func @_matmul_kernel(%arg0: i32, %arg1: i32, %arg2: i32, %arg3: memref<16x128xf32, #tpu.memory_space<vmem>>, %arg4: memref<128x128xbf16, #tpu.memory_space<vmem>>, %arg5: memref<16x128xf32, #tpu.memory_space<vmem>>, %arg6: memref<16x128xf32, #tpu.memory_space<vmem>>) attributes {dimension_semantics = [#tpu.dimension_semantics<parallel>, #tpu.dimension_semantics<parallel>, #tpu.dimension_semantics<arbitrary>], iteration_bounds = array<i64: 1, 1, 1>, scalar_prefetch = 0 : i64, scratch_operands = 1 : i64, tpu.core_type = #tpu.core_type<tc>, window_params = [{transform_indices = @transform_0, window_bounds = array<i64: 16, 128>}, {transform_indices = @transform_1, window_bounds = array<i64: 128, 128>}, {transform_indices = @transform_2, window_bounds = array<i64: 16, 128>}]} {
    %c0_i32 = arith.constant 0 : i32
    %0 = arith.cmpi eq, %arg2, %c0_i32 : i32
    %1 = arith.extui %0 : i1 to i32
    %c0_i32_0 = arith.constant 0 : i32
    %2 = arith.cmpi ne, %1, %c0_i32_0 : i32
    scf.if %2 {
      %cst_10 = arith.constant 0.000000e+00 : f32
      %13 = vector.broadcast %cst_10 : f32 to vector<16x128xf32>
      %c0_11 = arith.constant 0 : index
      %c0_12 = arith.constant 0 : index
      %14 = vector.load %arg6[%c0_11, %c0_12] : memref<16x128xf32, #tpu.memory_space<vmem>>, vector<16x128xf32>
      tpu.vector_store %arg6[%c0_11, %c0_12], %13 {strides = array<i32>} : memref<16x128xf32, #tpu.memory_space<vmem>>, vector<16x128xf32>,
    } else {
    }
    %c0 = arith.constant 0 : index
    %c0_1 = arith.constant 0 : index
    %3 = vector.load %arg6[%c0, %c0_1] : memref<16x128xf32, #tpu.memory_space<vmem>>, vector<16x128xf32>
    %c0_2 = arith.constant 0 : index
    %c0_3 = arith.constant 0 : index
    %4 = vector.load %arg3[%c0_2, %c0_3] : memref<16x128xf32, #tpu.memory_space<vmem>>, vector<16x128xf32>
    %5 = arith.truncf %4 : vector<16x128xf32> to vector<16x128xbf16>
    %c0_4 = arith.constant 0 : index
    %c0_5 = arith.constant 0 : index
    %6 = vector.load %arg4[%c0_4, %c0_5] : memref<128x128xbf16, #tpu.memory_space<vmem>>, vector<128x128xbf16>
    %cst = arith.constant dense<0.000000e+00> : vector<16x128xf32>
    %7 = tpu.matmul %5, %6, %cst {dimension_numbers = #tpu.dot_dimension_numbers<[1], [0], [0], [1], [0, 0, 1, 1], [], []>} : vector<16x128xbf16>, vector<128x128xbf16>, vector<16x128xf32> -> vector<16x128xf32>
    %8 = arith.addf %3, %7 : vector<16x128xf32>
    %c0_6 = arith.constant 0 : index
    %c0_7 = arith.constant 0 : index
    %9 = vector.load %arg6[%c0_6, %c0_7] : memref<16x128xf32, #tpu.memory_space<vmem>>, vector<16x128xf32>
    tpu.vector_store %arg6[%c0_6, %c0_7], %8 {strides = array<i32>} : memref<16x128xf32, #tpu.memory_space<vmem>>, vector<16x128xf32>,
    %c0_i32_8 = arith.constant 0 : i32
    %10 = arith.cmpi eq, %arg2, %c0_i32_8 : i32
    %11 = arith.extui %10 : i1 to i32
    %c0_i32_9 = arith.constant 0 : i32
    %12 = arith.cmpi ne, %11, %c0_i32_9 : i32
    scf.if %12 {
      %c0_10 = arith.constant 0 : index
      %c0_11 = arith.constant 0 : index
      %13 = vector.load %arg6[%c0_10, %c0_11] : memref<16x128xf32, #tpu.memory_space<vmem>>, vector<16x128xf32>
      %c0_12 = arith.constant 0 : index
      %c0_13 = arith.constant 0 : index
      %14 = vector.load %arg5[%c0_12, %c0_13] : memref<16x128xf32, #tpu.memory_space<vmem>>, vector<16x128xf32>
      tpu.vector_store %arg5[%c0_12, %c0_13], %13 {strides = array<i32>} : memref<16x128xf32, #tpu.memory_space<vmem>>, vector<16x128xf32>,
    } else {
    }
    return
  }
  func.func @transform_0(%arg0: i32, %arg1: i32, %arg2: i32) -> (i32, i32) {
    %c0_i32 = arith.constant 0 : i32
    return %arg0, %arg2 : i32, i32
  }
  func.func @transform_1(%arg0: i32, %arg1: i32, %arg2: i32) -> (i32, i32) {
    %c0_i32 = arith.constant 0 : i32
    return %arg2, %arg1 : i32, i32
  }
  func.func @transform_2(%arg0: i32, %arg1: i32, %arg2: i32) -> (i32, i32) {
    %c0_i32 = arith.constant 0 : i32
    return %arg0, %arg1 : i32, i32
  }
}

</mosaic_0001>

<llo_original>
// kernel: conv_transformer_forward.7
$region0: #{conv_transformer_forward.7}
  #allocation0 [shape = 'u32[]', space=smem, size = 0x4, offset = 0x4, fixed_abs, tag = 'smem constant byte address 0x4 - core index']
  #allocation1 [shape = 'u32[144,128]{1,0:T(1,128)}', space=vmem, size = 0x12000, scoped, tag = 'internal scratch']
  #allocation2 [shape = 'f32[16,128]{1,0:T(8,128)}', space=vmem, size = 0x2000, scoped, tag = 'scratch operand']
  %s0 = inlined_call_operand.vmem [shape: f32[16,128], index: 0, kind: input, shape index: {}]
  %s1 = inlined_call_operand.vmem [shape: bf16[128,128], index: 1, kind: input, shape index: {}]
  %s2 = inlined_call_operand.vmem [shape: f32[16,128], index: 2, kind: output, shape index: {}]
  %s3 = sld [smem:[#allocation0]]
  $region26: #{conv_transformer_forward.7} parent=0
    _
  %s5 = ssub.s32 1, %s3
  %s6 = scalar_select 0, %s5, %s3
  // Predicated region
  $region2: #{conv_transformer_forward.7} parent=0 // pred_check
    _
  $region3: #{conv_transformer_forward.7} parent=0 // pred_check_branch
    %8 = sbr.rel (0) target = $region5
  $region4: #{conv_transformer_forward.7} parent=0 // pred_region
    _
  $region5: #{conv_transformer_forward.7} parent=0 // pred_fallthru
    _
  // Predicated region
  $region6: #{conv_transformer_forward.7} parent=0 // pred_check
    _
  $region7: #{conv_transformer_forward.7} parent=0 // pred_check_branch
    %10 = sbr.rel (0) target = $region9
  $region8: #{conv_transformer_forward.7} parent=0 // pred_region
    _
  $region9: #{conv_transformer_forward.7} parent=0 // pred_fallthru
    _
  %p12 = scmp.eq.s32.totalorder 0, 0
  // Predicated region
  $region10: #{conv_transformer_forward.7} parent=0 // pred_check
    %p13 = pneg %p12
  $region11: #{conv_transformer_forward.7} parent=0 // pred_check_branch
    %15 = sbr.rel (%p13) target = $region13
  $region12: #{conv_transformer_forward.7} parent=0 // pred_region
    %16 = vst [vmem:[#allocation2] sm:$0xff] 0.0
    %17 = vst [vmem:[#allocation2 + $0x8] sm:$0xff] 0.0
  $region13: #{conv_transformer_forward.7} parent=0 // pred_fallthru
    _
  %v18 = vld [vmem:[#allocation2] sm:$0xff]
  %v19 = vld [vmem:[#allocation2 + $0x8] sm:$0xff]
  %v20 = vld [vmem:[%s0] sm:$0xff]
  %v21 = vld [vmem:[%s0 + $0x8] sm:$0xff]
  %v22 = vpack.c.bf16 %v21, %v20
  %v23 = vld [vmem:[%s1] sm:$0xf]
  %v24 = vld [vmem:[%s1 + $0x4] sm:$0xf]
  %v25 = vld [vmem:[%s1 + $0x8] sm:$0xf]
  %v26 = vld [vmem:[%s1 + $0xc] sm:$0xf]
  %v27 = vld [vmem:[%s1 + $0x10] sm:$0xf]
  %v28 = vld [vmem:[%s1 + $0x14] sm:$0xf]
  %v29 = vld [vmem:[%s1 + $0x18] sm:$0xf]
  %v30 = vld [vmem:[%s1 + $0x1c] sm:$0xf]
  %v31 = vld [vmem:[%s1 + $0x20] sm:$0xf]
  %v32 = vld [vmem:[%s1 + $0x24] sm:$0xf]
  %v33 = vld [vmem:[%s1 + $0x28] sm:$0xf]
  %v34 = vld [vmem:[%s1 + $0x2c] sm:$0xf]
  %v35 = vld [vmem:[%s1 + $0x30] sm:$0xf]
  %v36 = vld [vmem:[%s1 + $0x34] sm:$0xf]
  %v37 = vld [vmem:[%s1 + $0x38] sm:$0xf]
  %v38 = vld [vmem:[%s1 + $0x3c] sm:$0xf]
  %v55 = vunpack.c.l.b16 %v23
  %v56 = vunpack.c.l.b16 %v24
  %v57 = vunpack.c.l.b16 %v25
  %v58 = vunpack.c.l.b16 %v26
  %v59 = vunpack.c.l.b16 %v27
  %v60 = vunpack.c.l.b16 %v28
  %v61 = vunpack.c.l.b16 %v29
  %v62 = vunpack.c.l.b16 %v30
  %v63 = vunpack.c.l.b16 %v31
  %v64 = vunpack.c.l.b16 %v32
  %v65 = vunpack.c.l.b16 %v33
  %v66 = vunpack.c.l.b16 %v34
  %v67 = vunpack.c.l.b16 %v35
  %v68 = vunpack.c.l.b16 %v36
  %v69 = vunpack.c.l.b16 %v37
  %v70 = vunpack.c.l.b16 %v38
  %v71 = vpack.c.b16 %v56, %v55
  %v72 = vpack.c.b16 %v58, %v57
  %v73 = vpack.c.b16 %v60, %v59
  %v74 = vpack.c.b16 %v62, %v61
  %v75 = vpack.c.b16 %v64, %v63
  %v76 = vpack.c.b16 %v66, %v65
  %v77 = vpack.c.b16 %v68, %v67
  %v78 = vpack.c.b16 %v70, %v69
  %87 = vmatprep.subr.bf16.mxu0 0
  %88 = vmatpush1.bf16.msra.mxu0 %v71
  %89 = vmatprep.subr.bf16.mxu0 0
  %90 = vmatpush1.bf16.msra.mxu0 %v72
  %91 = vmatprep.subr.bf16.mxu0 0
  %92 = vmatpush1.bf16.msra.mxu0 %v73
  %93 = vmatprep.subr.bf16.mxu0 0
  %94 = vmatpush1.bf16.msra.mxu0 %v74
  %95 = vmatprep.subr.bf16.mxu0 0
  %96 = vmatpush1.bf16.msra.mxu0 %v75
  %97 = vmatprep.subr.bf16.mxu0 0
  %98 = vmatpush1.bf16.msra.mxu0 %v76
  %99 = vmatprep.subr.bf16.mxu0 0
  %100 = vmatpush1.bf16.msra.mxu0 %v77
  %101 = vmatprep.subr.bf16.mxu0 0
  %102 = vmatpush1.bf16.msra.mxu0 %v78
  %103 = vmatprep.subr.bf16.mxu0 0
  %104 = vmatpush1.bf16.msra.mxu0 0
  %105 = vmatprep.subr.bf16.mxu0 0
  %106 = vmatpush1.bf16.msra.mxu0 0
  %107 = vmatprep.subr.bf16.mxu0 0
  %108 = vmatpush1.bf16.msra.mxu0 0
  %109 = vmatprep.subr.bf16.mxu0 0
  %110 = vmatpush1.bf16.msra.mxu0 0
  %111 = vmatprep.subr.bf16.mxu0 0
  %112 = vmatpush1.bf16.msra.mxu0 0
  %113 = vmatprep.subr.bf16.mxu0 0
  %114 = vmatpush1.bf16.msra.mxu0 0
  %115 = vmatprep.subr.bf16.mxu0 0
  %116 = vmatpush1.bf16.msra.mxu0 0
  %117 = vmatprep.subr.bf16.mxu0 0
  %118 = vmatpush1.bf16.msra.mxu0 0
  %119 = vmatprep.mubr.bf16.mxu0 0
  %120 = vmatmul.mubr.bf16.gmra.mrb[0].mxu0 %v22
  %v121 = vpop.f32.mrb[0].mxu0
  %v122 = vadd.f32 0.0, %v121
  %v123 = vpop.f32.mrb[0].mxu0
  %v124 = vpop.f32.mrb[0].mxu0
  %v125 = vadd.f32 0.0, %v124
  %v126 = vpop.f32.mrb[0].mxu0
  %127 = vdwg.mxu0
  %v128 = vadd.f32 %v18, %v122
  %v129 = vadd.f32 %v19, %v125
  %130 = vst [vmem:[#allocation2] sm:$0xff] %v128
  %131 = vst [vmem:[#allocation2 + $0x8] sm:$0xff] %v129
  // Predicated region
  $region14: #{conv_transformer_forward.7} parent=0 // pred_check
    %p132 = pneg %p12
  $region15: #{conv_transformer_forward.7} parent=0 // pred_check_branch
    %134 = sbr.rel (%p132) target = $region17
  $region16: #{conv_transformer_forward.7} parent=0 // pred_region
    %v135 = vld [vmem:[#allocation2] sm:$0xff]
    %v136 = vld [vmem:[#allocation2 + $0x8] sm:$0xff]
    %137 = vst [vmem:[%s2] sm:$0xff] %v135
    %138 = vst [vmem:[%s2 + $0x8] sm:$0xff] %v136
  $region17: #{conv_transformer_forward.7} parent=0 // pred_fallthru
    _
  // Predicated region
  $region18: #{conv_transformer_forward.7} parent=0 // pred_check
    _
  $region19: #{conv_transformer_forward.7} parent=0 // pred_check_branch
    %140 = sbr.rel (0) target = $region21
  $region20: #{conv_transformer_forward.7} parent=0 // pred_region
    _
  $region21: #{conv_transformer_forward.7} parent=0 // pred_fallthru
    _
  // Predicated region
  $region22: #{conv_transformer_forward.7} parent=0 // pred_check
    _
  $region23: #{conv_transformer_forward.7} parent=0 // pred_check_branch
    %142 = sbr.rel (0) target = $region25
  $region24: #{conv_transformer_forward.7} parent=0 // pred_region
    _
  $region25: #{conv_transformer_forward.7} parent=0 // pred_fallthru
    _

// kernel: conv_transformer_forward.4
$region0: #{conv_transformer_forward.4}
  #allocation0 [shape = 'u32[]', space=smem, size = 0x4, offset = 0x4, fixed_abs, tag = 'smem constant byte address 0x4 - core index']
  #allocation1 [shape = 'u32[144,128]{1,0:T(1,128)}', space=vmem, size = 0x12000, scoped, tag = 'internal scratch']
  %s0 = inlined_call_operand.vmem [shape: f32[16,16], index: 0, kind: input, shape index: {}]
  %s1 = inlined_call_operand.vmem [shape: bf16[16,64], index: 1, kind: input, shape index: {}]
  %s2 = inlined_call_operand.vmem [shape: f32[1,64], index: 2, kind: input, shape index: {}]
  %s3 = inlined_call_operand.vmem [shape: f32[1,64], index: 3, kind: input, shape index: {}]
  %s4 = inlined_call_operand.vmem [shape: bf16[64,64], index: 4, kind: input, shape index: {}]
  %s5 = inlined_call_operand.vmem [shape: f32[1,64], index: 5, kind: input, shape index: {}]
  %s6 = inlined_call_operand.vmem [shape: f32[1,64], index: 6, kind: input, shape index: {}]
  %s7 = inlined_call_operand.vmem [shape: bf16[64,128], index: 7, kind: input, shape index: {}]
  %s8 = inlined_call_operand.vmem [shape: f32[1,128], index: 8, kind: input, shape index: {}]
  %s9 = inlined_call_operand.vmem [shape: f32[1,128], index: 9, kind: input, shape index: {}]
  %s10 = inlined_call_operand.vmem [shape: bf16[128,128], index: 10, kind: input, shape index: {}]
  %s11 = inlined_call_operand.vmem [shape: f32[1,128], index: 11, kind: input, shape index: {}]
  %s12 = inlined_call_operand.vmem [shape: f32[1,128], index: 12, kind: input, shape index: {}]
  %s13 = inlined_call_operand.vmem [shape: f32[16,128], index: 13, kind: output, shape index: {}]
  %s14 = sld [smem:[#allocation0]]
  $region85: #{conv_transformer_forward.4} parent=0
    _
  %s16 = ssub.s32 1, %s14
  %s17 = scalar_select 0, %s16, %s14
  loop: start=0, step=1, limit=4
  $region2: #{conv_transformer_forward.4} parent=0 // loop_pre_header
    _
  $region3: #{conv_transformer_forward.4} parent=0 // loop_header
    %s19 = sphi 0, %s23
    %p20 = scmp.ge.s32.totalorder %s19, 4
    %s29 = sphi 0, %s31
    %s32 = sphi 0, %s29
    %s33 = sphi 0, %s32
    %s49 = sphi 0, %s33
    %s53 = sphi 0, %s53
    %s55 = sphi 0, %s53
    %s56 = sphi 0, %s55
    %s70 = sphi 0, %s56
    %s74 = sphi 0, %s74
    %s76 = sphi 0, %s74
    %s77 = sphi 0, %s76
    %s91 = sphi 0, %s77
    %s95 = sphi 0, %s95
    %s97 = sphi 0, %s95
    %s98 = sphi 0, %s97
    %s112 = sphi 0, %s98
    %s116 = sphi 0, %s116
    %s118 = sphi 0, %s116
    %s119 = sphi 0, %s118
    %s133 = sphi 0, %s119
    %s137 = sphi 0, %s137
    %s139 = sphi 0, %s137
    %s140 = sphi 0, %s139
    %s154 = sphi 0, %s140
    %s158 = sphi 0, %s158
    %s160 = sphi 0, %s158
    %s161 = sphi 0, %s160
    %s175 = sphi 0, %s161
    %s179 = sphi 0, %s179
    %s181 = sphi 0, %s179
    %s182 = sphi 0, %s181
    %s196 = sphi 0, %s182
    %s200 = sphi 0, %s200
    %s202 = sphi 0, %s200
    %s203 = sphi 0, %s202
    %s217 = sphi 0, %s203
    %s221 = sphi 0, %s221
    %s223 = sphi 0, %s221
    %s224 = sphi 0, %s223
    %s238 = sphi 0, %s224
    %s242 = sphi 0, %s242
    %s244 = sphi 0, %s242
    %s245 = sphi 0, %s244
    %s259 = sphi 0, %s245
    %s263 = sphi 0, %s263
    %s265 = sphi 0, %s263
    %s266 = sphi 0, %s265
    %s280 = sphi 0, %s266
    %s284 = sphi 0, %s284
    %s286 = sphi 0, %s284
    %s287 = sphi 0, %s286
    %s301 = sphi 0, %s287
    %s307 = sphi 0, %s309
    %s310 = sphi 0, %s307
    %s311 = sphi 0, %s310
    %s327 = sphi 0, %s311
  $region4: #{conv_transformer_forward.4} parent=0 // loop_header_branch
    %22 = sbr.rel (%p20) target = $region8
  $region5: #{conv_transformer_forward.4} parent=0 // loop_body
    %s24 = ssub.s32 %s19, 1
    %s25 = ssub.s32 %s19, 2
    %s26 = sadd.s32 %s19, 1
    %s27 = ssub.s32 %s19, %s26
    %p28 = scmp.eq.s32.totalorder %s27, 0
    %s30 = sadd.s32 %s29, 1
    %s31 = scalar_select %p28, %s29, %s30
    %p34 = pneg %p28
    %p35 = scmp.eq.s32.totalorder %s19, 1
    %p36 = por %p34, %p35
    %p37 = scmp.ne.s32.totalorder %s29, %s32
    %p38 = scmp.eq.s32.totalorder %s19, 0
    %p39 = por %p37, %p38
    %p40 = scmp.ne.s32.totalorder %s29, %s32
    %p41 = scmp.eq.s32.totalorder %s24, 1
    %p42 = por %p40, %p41
    %p43 = scmp.ne.s32.totalorder %s32, %s33
    %p44 = scmp.eq.s32.totalorder %s24, 0
    %p45 = por %p43, %p44
    %p46 = scmp.ne.s32.totalorder %s32, %s33
    %p47 = scmp.eq.s32.totalorder %s25, 1
    %p48 = por %p46, %p47
    %p50 = scmp.ne.s32.totalorder %s33, %s49
    %p51 = scmp.eq.s32.totalorder %s25, 0
    %p52 = por %p50, %p51
    %s54 = sadd.s32 %s53, 1
    %p57 = scmp.eq.s32.totalorder %s19, 1
    %p58 = scmp.ne.s32.totalorder %s53, %s55
    %p59 = scmp.eq.s32.totalorder %s19, 0
    %p60 = por %p58, %p59
    %p61 = scmp.ne.s32.totalorder %s53, %s55
    %p62 = scmp.eq.s32.totalorder %s24, 1
    %p63 = por %p61, %p62
    %p64 = scmp.ne.s32.totalorder %s55, %s56
    %p65 = scmp.eq.s32.totalorder %s24, 0
    %p66 = por %p64, %p65
    %p67 = scmp.ne.s32.totalorder %s55, %s56
    %p68 = scmp.eq.s32.totalorder %s25, 1
    %p69 = por %p67, %p68
    %p71 = scmp.ne.s32.totalorder %s56, %s70
    %p72 = scmp.eq.s32.totalorder %s25, 0
    %p73 = por %p71, %p72
    %s75 = sadd.s32 %s74, 1
    %p78 = scmp.eq.s32.totalorder %s19, 1
    %p79 = scmp.ne.s32.totalorder %s74, %s76
    %p80 = scmp.eq.s32.totalorder %s19, 0
    %p81 = por %p79, %p80
    %p82 = scmp.ne.s32.totalorder %s74, %s76
    %p83 = scmp.eq.s32.totalorder %s24, 1
    %p84 = por %p82, %p83
    %p85 = scmp.ne.s32.totalorder %s76, %s77
    %p86 = scmp.eq.s32.totalorder %s24, 0
    %p87 = por %p85, %p86
    %p88 = scmp.ne.s32.totalorder %s76, %s77
    %p89 = scmp.eq.s32.totalorder %s25, 1
    %p90 = por %p88, %p89
    %p92 = scmp.ne.s32.totalorder %s77, %s91
    %p93 = scmp.eq.s32.totalorder %s25, 0
    %p94 = por %p92, %p93
    %s96 = sadd.s32 %s95, 1
    %p99 = scmp.eq.s32.totalorder %s19, 1
    %p100 = scmp.ne.s32.totalorder %s95, %s97
    %p101 = scmp.eq.s32.totalorder %s19, 0
    %p102 = por %p100, %p101
    %p103 = scmp.ne.s32.totalorder %s95, %s97
    %p104 = scmp.eq.s32.totalorder %s24, 1
    %p105 = por %p103, %p104
    %p106 = scmp.ne.s32.totalorder %s97, %s98
    %p107 = scmp.eq.s32.totalorder %s24, 0
    %p108 = por %p106, %p107
    %p109 = scmp.ne.s32.totalorder %s97, %s98
    %p110 = scmp.eq.s32.totalorder %s25, 1
    %p111 = por %p109, %p110
    %p113 = scmp.ne.s32.totalorder %s98, %s112
    %p114 = scmp.eq.s32.totalorder %s25, 0
    %p115 = por %p113, %p114
    %s117 = sadd.s32 %s116, 1
    %p120 = scmp.eq.s32.totalorder %s19, 1
    %p121 = scmp.ne.s32.totalorder %s116, %s118
    %p122 = scmp.eq.s32.totalorder %s19, 0
    %p123 = por %p121, %p122
    %p124 = scmp.ne.s32.totalorder %s116, %s118
    %p125 = scmp.eq.s32.totalorder %s24, 1
    %p126 = por %p124, %p125
    %p127 = scmp.ne.s32.totalorder %s118, %s119
    %p128 = scmp.eq.s32.totalorder %s24, 0
    %p129 = por %p127, %p128
    %p130 = scmp.ne.s32.totalorder %s118, %s119
    %p131 = scmp.eq.s32.totalorder %s25, 1
    %p132 = por %p130, %p131
    %p134 = scmp.ne.s32.totalorder %s119, %s133
    %p135 = scmp.eq.s32.totalorder %s25, 0
    %p136 = por %p134, %p135
    %s138 = sadd.s32 %s137, 1
    %p141 = scmp.eq.s32.totalorder %s19, 1
    %p142 = scmp.ne.s32.totalorder %s137, %s139
    %p143 = scmp.eq.s32.totalorder %s19, 0
    %p144 = por %p142, %p143
    %p145 = scmp.ne.s32.totalorder %s137, %s139
    %p146 = scmp.eq.s32.totalorder %s24, 1
    %p147 = por %p145, %p146
    %p148 = scmp.ne.s32.totalorder %s139, %s140
    %p149 = scmp.eq.s32.totalorder %s24, 0
    %p150 = por %p148, %p149
    %p151 = scmp.ne.s32.totalorder %s139, %s140
    %p152 = scmp.eq.s32.totalorder %s25, 1
    %p153 = por %p151, %p152
    %p155 = scmp.ne.s32.totalorder %s140, %s154
    %p156 = scmp.eq.s32.totalorder %s25, 0
    %p157 = por %p155, %p156
    %s159 = sadd.s32 %s158, 1
    %p162 = scmp.eq.s32.totalorder %s19, 1
    %p163 = scmp.ne.s32.totalorder %s158, %s160
    %p164 = scmp.eq.s32.totalorder %s19, 0
    %p165 = por %p163, %p164
    %p166 = scmp.ne.s32.totalorder %s158, %s160
    %p167 = scmp.eq.s32.totalorder %s24, 1
    %p168 = por %p166, %p167
    %p169 = scmp.ne.s32.totalorder %s160, %s161
    %p170 = scmp.eq.s32.totalorder %s24, 0
    %p171 = por %p169, %p170
    %p172 = scmp.ne.s32.totalorder %s160, %s161
    %p173 = scmp.eq.s32.totalorder %s25, 1
    %p174 = por %p172, %p173
    %p176 = scmp.ne.s32.totalorder %s161, %s175
    %p177 = scmp.eq.s32.totalorder %s25, 0
    %p178 = por %p176, %p177
    %s180 = sadd.s32 %s179, 1
    %p183 = scmp.eq.s32.totalorder %s19, 1
    %p184 = scmp.ne.s32.totalorder %s179, %s181
    %p185 = scmp.eq.s32.totalorder %s19, 0
    %p186 = por %p184, %p185
    %p187 = scmp.ne.s32.totalorder %s179, %s181
    %p188 = scmp.eq.s32.totalorder %s24, 1
    %p189 = por %p187, %p188
    %p190 = scmp.ne.s32.totalorder %s181, %s182
    %p191 = scmp.eq.s32.totalorder %s24, 0
    %p192 = por %p190, %p191
    %p193 = scmp.ne.s32.totalorder %s181, %s182
    %p194 = scmp.eq.s32.totalorder %s25, 1
    %p195 = por %p193, %p194
    %p197 = scmp.ne.s32.totalorder %s182, %s196
    %p198 = scmp.eq.s32.totalorder %s25, 0
    %p199 = por %p197, %p198
    %s201 = sadd.s32 %s200, 1
    %p204 = scmp.eq.s32.totalorder %s19, 1
    %p205 = scmp.ne.s32.totalorder %s200, %s202
    %p206 = scmp.eq.s32.totalorder %s19, 0
    %p207 = por %p205, %p206
    %p208 = scmp.ne.s32.totalorder %s200, %s202
    %p209 = scmp.eq.s32.totalorder %s24, 1
    %p210 = por %p208, %p209
    %p211 = scmp.ne.s32.totalorder %s202, %s203
    %p212 = scmp.eq.s32.totalorder %s24, 0
    %p213 = por %p211, %p212
    %p214 = scmp.ne.s32.totalorder %s202, %s203
    %p215 = scmp.eq.s32.totalorder %s25, 1
    %p216 = por %p214, %p215
    %p218 = scmp.ne.s32.totalorder %s203, %s217
    %p219 = scmp.eq.s32.totalorder %s25, 0
    %p220 = por %p218, %p219
    %s222 = sadd.s32 %s221, 1
    %p225 = scmp.eq.s32.totalorder %s19, 1
    %p226 = scmp.ne.s32.totalorder %s221, %s223
    %p227 = scmp.eq.s32.totalorder %s19, 0
    %p228 = por %p226, %p227
    %p229 = scmp.ne.s32.totalorder %s221, %s223
    %p230 = scmp.eq.s32.totalorder %s24, 1
    %p231 = por %p229, %p230
    %p232 = scmp.ne.s32.totalorder %s223, %s224
    %p233 = scmp.eq.s32.totalorder %s24, 0
    %p234 = por %p232, %p233
    %p235 = scmp.ne.s32.totalorder %s223, %s224
    %p236 = scmp.eq.s32.totalorder %s25, 1
    %p237 = por %p235, %p236
    %p239 = scmp.ne.s32.totalorder %s224, %s238
    %p240 = scmp.eq.s32.totalorder %s25, 0
    %p241 = por %p239, %p240
    %s243 = sadd.s32 %s242, 1
    %p246 = scmp.eq.s32.totalorder %s19, 1
    %p247 = scmp.ne.s32.totalorder %s242, %s244
    %p248 = scmp.eq.s32.totalorder %s19, 0
    %p249 = por %p247, %p248
    %p250 = scmp.ne.s32.totalorder %s242, %s244
    %p251 = scmp.eq.s32.totalorder %s24, 1
    %p252 = por %p250, %p251
    %p253 = scmp.ne.s32.totalorder %s244, %s245
    %p254 = scmp.eq.s32.totalorder %s24, 0
    %p255 = por %p253, %p254
    %p256 = scmp.ne.s32.totalorder %s244, %s245
    %p257 = scmp.eq.s32.totalorder %s25, 1
    %p258 = por %p256, %p257
    %p260 = scmp.ne.s32.totalorder %s245, %s259
    %p261 = scmp.eq.s32.totalorder %s25, 0
    %p262 = por %p260, %p261
    %s264 = sadd.s32 %s263, 1
    %p267 = scmp.eq.s32.totalorder %s19, 1
    %p268 = scmp.ne.s32.totalorder %s263, %s265
    %p269 = scmp.eq.s32.totalorder %s19, 0
    %p270 = por %p268, %p269
    %p271 = scmp.ne.s32.totalorder %s263, %s265
    %p272 = scmp.eq.s32.totalorder %s24, 1
    %p273 = por %p271, %p272
    %p274 = scmp.ne.s32.totalorder %s265, %s266
    %p275 = scmp.eq.s32.totalorder %s24, 0
    %p276 = por %p274, %p275
    %p277 = scmp.ne.s32.totalorder %s265, %s266
    %p278 = scmp.eq.s32.totalorder %s25, 1
    %p279 = por %p277, %p278
    %p281 = scmp.ne.s32.totalorder %s266, %s280
    %p282 = scmp.eq.s32.totalorder %s25, 0
    %p283 = por %p281, %p282
    %s285 = sadd.s32 %s284, 1
    %p288 = scmp.eq.s32.totalorder %s19, 1
    %p289 = scmp.ne.s32.totalorder %s284, %s286
    %p290 = scmp.eq.s32.totalorder %s19, 0
    %p291 = por %p289, %p290
    %p292 = scmp.ne.s32.totalorder %s284, %s286
    %p293 = scmp.eq.s32.totalorder %s24, 1
    %p294 = por %p292, %p293
    %p295 = scmp.ne.s32.totalorder %s286, %s287
    %p296 = scmp.eq.s32.totalorder %s24, 0
    %p297 = por %p295, %p296
    %p298 = scmp.ne.s32.totalorder %s286, %s287
    %p299 = scmp.eq.s32.totalorder %s25, 1
    %p300 = por %p298, %p299
    %p302 = scmp.ne.s32.totalorder %s287, %s301
    %p303 = scmp.eq.s32.totalorder %s25, 0
    %p304 = por %p302, %p303
    %s305 = ssub.s32 %s19, %s26
    %p306 = scmp.eq.s32.totalorder %s305, 0
    %s308 = sadd.s32 %s307, 1
    %s309 = scalar_select %p306, %s307, %s308
    %p312 = pneg %p306
    %p313 = scmp.eq.s32.totalorder %s19, 1
    %p314 = por %p312, %p313
    %p315 = scmp.ne.s32.totalorder %s307, %s310
    %p316 = scmp.eq.s32.totalorder %s19, 0
    %p317 = por %p315, %p316
    %p318 = scmp.ne.s32.totalorder %s307, %s310
    %p319 = scmp.eq.s32.totalorder %s24, 1
    %p320 = por %p318, %p319
    %p321 = scmp.ne.s32.totalorder %s310, %s311
    %p322 = scmp.eq.s32.totalorder %s24, 0
    %p323 = por %p321, %p322
    %p324 = scmp.ne.s32.totalorder %s310, %s311
    %p325 = scmp.eq.s32.totalorder %s25, 1
    %p326 = por %p324, %p325
    %p328 = scmp.ne.s32.totalorder %s311, %s327
    %p329 = scmp.eq.s32.totalorder %s25, 0
    %p330 = por %p328, %p329
    %p331 = scmp.le.s32.totalorder 1, %s19
    %p332 = scmp.lt.s32.totalorder %s19, 3
    %p333 = pnand %p331, %p332
    %p334 = pneg %p333
    // Predicated region
    $region9: #{conv_transformer_forward.4} parent=5 // pred_check
      _
    $region10: #{conv_transformer_forward.4} parent=5 // pred_check_branch
      %336 = sbr.rel (%p333) target = $region12
    $region11: #{conv_transformer_forward.4} parent=5 // pred_region
      %s337 = ssub.s32 %s19, 1
      // Predicated region
      $region13: #{conv_transformer_forward.4} parent=11 // pred_check
        %p338 = pneg %p66
      $region14: #{conv_transformer_forward.4} parent=11 // pred_check_branch
        %340 = sbr.rel (%p338) target = $region16
      $region15: #{conv_transformer_forward.4} parent=11 // pred_region
        _
      $region16: #{conv_transformer_forward.4} parent=11 // pred_fallthru
        _
      // Predicated region
      $region17: #{conv_transformer_forward.4} parent=11 // pred_check
        %p341 = pneg %p87
      $region18: #{conv_transformer_forward.4} parent=11 // pred_check_branch
        %343 = sbr.rel (%p341) target = $region20
      $region19: #{conv_transformer_forward.4} parent=11 // pred_region
        _
      $region20: #{conv_transformer_forward.4} parent=11 // pred_fallthru
        _
      // Predicated region
      $region21: #{conv_transformer_forward.4} parent=11 // pred_check
        %p344 = pneg %p108
      $region22: #{conv_transformer_forward.4} parent=11 // pred_check_branch
        %346 = sbr.rel (%p344) target = $region24
      $region23: #{conv_transformer_forward.4} parent=11 // pred_region
        _
      $region24: #{conv_transformer_forward.4} parent=11 // pred_fallthru
        _
      // Predicated region
      $region25: #{conv_transformer_forward.4} parent=11 // pred_check
        %p347 = pneg %p129
      $region26: #{conv_transformer_forward.4} parent=11 // pred_check_branch
        %349 = sbr.rel (%p347) target = $region28
      $region27: #{conv_transformer_forward.4} parent=11 // pred_region
        _
      $region28: #{conv_transformer_forward.4} parent=11 // pred_fallthru
        _
      // Predicated region
      $region29: #{conv_transformer_forward.4} parent=11 // pred_check
        %p350 = pneg %p150
      $region30: #{conv_transformer_forward.4} parent=11 // pred_check_branch
        %352 = sbr.rel (%p350) target = $region32
      $region31: #{conv_transformer_forward.4} parent=11 // pred_region
        _
      $region32: #{conv_transformer_forward.4} parent=11 // pred_fallthru
        _
      // Predicated region
      $region33: #{conv_transformer_forward.4} parent=11 // pred_check
        %p353 = pneg %p171
      $region34: #{conv_transformer_forward.4} parent=11 // pred_check_branch
        %355 = sbr.rel (%p353) target = $region36
      $region35: #{conv_transformer_forward.4} parent=11 // pred_region
        _
      $region36: #{conv_transformer_forward.4} parent=11 // pred_fallthru
        _
      // Predicated region
      $region37: #{conv_transformer_forward.4} parent=11 // pred_check
        %p356 = pneg %p192
      $region38: #{conv_transformer_forward.4} parent=11 // pred_check_branch
        %358 = sbr.rel (%p356) target = $region40
      $region39: #{conv_transformer_forward.4} parent=11 // pred_region
        _
      $region40: #{conv_transformer_forward.4} parent=11 // pred_fallthru
        _
      // Predicated region
      $region41: #{conv_transformer_forward.4} parent=11 // pred_check
        %p359 = pneg %p213
      $region42: #{conv_transformer_forward.4} parent=11 // pred_check_branch
        %361 = sbr.rel (%p359) target = $region44
      $region43: #{conv_transformer_forward.4} parent=11 // pred_region
        _
      $region44: #{conv_transformer_forward.4} parent=11 // pred_fallthru
        _
      // Predicated region
      $region45: #{conv_transformer_forward.4} parent=11 // pred_check
        %p362 = pneg %p234
      $region46: #{conv_transformer_forward.4} parent=11 // pred_check_branch
        %364 = sbr.rel (%p362) target = $region48
      $region47: #{conv_transformer_forward.4} parent=11 // pred_region
        _
      $region48: #{conv_transformer_forward.4} parent=11 // pred_fallthru
        _
      // Predicated region
      $region49: #{conv_transformer_forward.4} parent=11 // pred_check
        %p365 = pneg %p255
      $region50: #{conv_transformer_forward.4} parent=11 // pred_check_branch
        %367 = sbr.rel (%p365) target = $region52
      $region51: #{conv_transformer_forward.4} parent=11 // pred_region
        _
      $region52: #{conv_transformer_forward.4} parent=11 // pred_fallthru
        _
      // Predicated region
      $region53: #{conv_transformer_forward.4} parent=11 // pred_check
        %p368 = pneg %p276
      $region54: #{conv_transformer_forward.4} parent=11 // pred_check_branch
        %370 = sbr.rel (%p368) target = $region56
      $region55: #{conv_transformer_forward.4} parent=11 // pred_region
        _
      $region56: #{conv_transformer_forward.4} parent=11 // pred_fallthru
        _
      // Predicated region
      $region57: #{conv_transformer_forward.4} parent=11 // pred_check
        %p371 = pneg %p297
      $region58: #{conv_transformer_forward.4} parent=11 // pred_check_branch
        %373 = sbr.rel (%p371) target = $region60
      $region59: #{conv_transformer_forward.4} parent=11 // pred_region
        _
      $region60: #{conv_transformer_forward.4} parent=11 // pred_fallthru
        _
    $region12: #{conv_transformer_forward.4} parent=5 // pred_fallthru
      _
    %p374 = scmp.lt.s32.totalorder %s19, 2
    // Predicated region
    $region61: #{conv_transformer_forward.4} parent=5 // pred_check
      %p375 = pneg %p374
    $region62: #{conv_transformer_forward.4} parent=5 // pred_check_branch
      %377 = sbr.rel (%p375) target = $region64
    $region63: #{conv_transformer_forward.4} parent=5 // pred_region
      // Predicated region
      $region65: #{conv_transformer_forward.4} parent=63 // pred_check
        %p378 = pneg %p39
      $region66: #{conv_transformer_forward.4} parent=63 // pred_check_branch
        %380 = sbr.rel (%p378) target = $region68
      $region67: #{conv_transformer_forward.4} parent=63 // pred_region
        %p381 = scmp.lt.s32.totalorder %s19, 1
        %s382 = scalar_select %p381, %s19, 1
        %s383 = smul.addr %s382, 8
        %s384 = scalar_lea.vmem %s0, %s383
      $region68: #{conv_transformer_forward.4} parent=63 // pred_fallthru
        _
    $region64: #{conv_transformer_forward.4} parent=5 // pred_fallthru
      _
    %p385 = scmp.le.s32.totalorder 1, %s19
    %p386 = scmp.lt.s32.totalorder %s19, 3
    %p387 = pnand %p385, %p386
    %p388 = pneg %p387
    // Predicated region
    $region69: #{conv_transformer_forward.4} parent=5 // pred_check
      _
    $region70: #{conv_transformer_forward.4} parent=5 // pred_check_branch
      %390 = sbr.rel (%p387) target = $region72
    $region71: #{conv_transformer_forward.4} parent=5 // pred_region
      %s391 = ssub.s32 %s19, 1
      %p392 = scmp.lt.s32.totalorder %s24, 1
      %s393 = scalar_select %p392, %s24, 1
      %s394 = smul.addr %s393, 8
      %s395 = scalar_lea.vmem %s0, %s394
      %p396 = pneg %p45
      %p397 = pneg %p42
      %p398 = pneg %p66
      %p399 = pneg %p63
      %p400 = pneg %p87
      %p401 = pneg %p84
      %p402 = pneg %p108
      %p403 = pneg %p105
      %p404 = pneg %p129
      %p405 = pneg %p126
      %p406 = pneg %p150
      %p407 = pneg %p147
      %p408 = pneg %p171
      %p409 = pneg %p168
      %p410 = pneg %p192
      %p411 = pneg %p189
      %p412 = pneg %p213
      %p413 = pneg %p210
      %p414 = pneg %p234
      %p415 = pneg %p231
      %p416 = pneg %p255
      %p417 = pneg %p252
      %p418 = pneg %p276
      %p419 = pneg %p273
      %p420 = pneg %p297
      %p421 = pneg %p294
      %p422 = pneg %p323
      %p423 = pneg %p320
      %p424 = scmp.lt.s32.totalorder %s24, 1
      %s425 = scalar_select %p424, %s24, 1
      %s426 = smul.addr %s425, 8
      %s427 = scalar_lea.vmem %s13, %s426
      %p428 = scmp.lt.s32.totalorder %s24, 1
      %s429 = scalar_select %p428, %s24, 1
      %s430 = smul.addr %s429, 8
      %s431 = scalar_lea.vmem %s0, %s430
      %p432 = scmp.lt.s32.totalorder %s24, 1
      %s433 = scalar_select %p432, %s24, 1
      %s434 = smul.addr %s433, 8
      %s435 = scalar_lea.vmem %s13, %s434
      %v437 = vld [vmem:[%s431] sm:$0xff]
      %v438 = vpack.c.bf16 %v437, %v437
      %v439 = vld [vmem:[%s1] sm:$0xf]
      %v440 = vld [vmem:[%s1 + $0x4] sm:$0xf]
      %v443 = vunpack.c.l.b16 %v439
      %v444 = vunpack.c.l.b16 %v440
      %v445 = vpack.c.b16 %v444, %v443
      %vm447 = vcmask 130048
      %v449 = vsel %vm447, %v438, 0
      %451 = vmatprep.subr.bf16.mxu0 0
      %452 = vmatpush1.bf16.msra.mxu0 %v445
      %453 = vmatprep.subr.bf16.mxu0 0
      %454 = vmatpush1.bf16.msra.mxu0 0
      %455 = vmatprep.subr.bf16.mxu0 0
      %456 = vmatpush1.bf16.msra.mxu0 0
      %457 = vmatprep.subr.bf16.mxu0 0
      %458 = vmatpush1.bf16.msra.mxu0 0
      %459 = vmatprep.subr.bf16.mxu0 0
      %460 = vmatpush1.bf16.msra.mxu0 0
      %461 = vmatprep.subr.bf16.mxu0 0
      %462 = vmatpush1.bf16.msra.mxu0 0
      %463 = vmatprep.subr.bf16.mxu0 0
      %464 = vmatpush1.bf16.msra.mxu0 0
      %465 = vmatprep.subr.bf16.mxu0 0
      %466 = vmatpush1.bf16.msra.mxu0 0
      %467 = vmatprep.subr.bf16.mxu0 0
      %468 = vmatpush1.bf16.msra.mxu0 0
      %469 = vmatprep.subr.bf16.mxu0 0
      %470 = vmatpush1.bf16.msra.mxu0 0
      %471 = vmatprep.subr.bf16.mxu0 0
      %472 = vmatpush1.bf16.msra.mxu0 0
      %473 = vmatprep.subr.bf16.mxu0 0
      %474 = vmatpush1.bf16.msra.mxu0 0
      %475 = vmatprep.subr.bf16.mxu0 0
      %476 = vmatpush1.bf16.msra.mxu0 0
      %477 = vmatprep.subr.bf16.mxu0 0
      %478 = vmatpush1.bf16.msra.mxu0 0
      %479 = vmatprep.subr.bf16.mxu0 0
      %480 = vmatpush1.bf16.msra.mxu0 0
      %481 = vmatprep.subr.bf16.mxu0 0
      %482 = vmatpush1.bf16.msra.mxu0 0
      %483 = vmatprep.mubr.bf16.mxu0 0
      %484 = vmatmul.mubr.bf16.gmra.mrb[0].mxu0 %v449
      %v485 = vpop.f32.mrb[0].mxu0
      %v486 = vadd.f32 0.0, %v485
      %v487 = vpop.f32.mrb[0].mxu0
      %v488 = vpop.f32.mrb[0].mxu0
      %v489 = vpop.f32.mrb[0].mxu0
      %490 = vdwg.mxu0
      %v491 = vmul.f32 %v486, 0.5
      %v492 = vtanh.pop %v491
      %v493 = vadd.f32 %v492, 1.0
      %v494 = vmul.f32 %v493, 0.5
      %v495 = vld [vmem:[%s2] sm:$0x1]
      %v497 = vlaneseq
      %v498 = vshrl.u32 %v497, 7
      %v499 = vsub.s32 0, %v498
      %v500 = vrot.slane %v495, %v499
      %v502 = vmul.f32 %v494, %v500
      %v503 = vld [vmem:[%s3] sm:$0x1]
      %v505 = vlaneseq
      %v506 = vshrl.u32 %v505, 7
      %v507 = vsub.s32 0, %v506
      %v508 = vrot.slane %v503, %v507
      %v510 = vadd.f32 %v502, %v508
      %v511 = vpack.c.bf16 %v510, %v510
      %v512 = vld [vmem:[%s4] sm:$0xf]
      %v513 = vld [vmem:[%s4 + $0x4] sm:$0xf]
      %v514 = vld [vmem:[%s4 + $0x8] sm:$0xf]
      %v515 = vld [vmem:[%s4 + $0xc] sm:$0xf]
      %v516 = vld [vmem:[%s4 + $0x10] sm:$0xf]
      %v517 = vld [vmem:[%s4 + $0x14] sm:$0xf]
      %v518 = vld [vmem:[%s4 + $0x18] sm:$0xf]
      %v519 = vld [vmem:[%s4 + $0x1c] sm:$0xf]
      %v528 = vunpack.c.l.b16 %v512
      %v529 = vunpack.c.l.b16 %v513
      %v530 = vunpack.c.l.b16 %v514
      %v531 = vunpack.c.l.b16 %v515
      %v532 = vunpack.c.l.b16 %v516
      %v533 = vunpack.c.l.b16 %v517
      %v534 = vunpack.c.l.b16 %v518
      %v535 = vunpack.c.l.b16 %v519
      %v536 = vpack.c.b16 %v529, %v528
      %v537 = vpack.c.b16 %v531, %v530
      %v538 = vpack.c.b16 %v533, %v532
      %v539 = vpack.c.b16 %v535, %v534
      %vm544 = vcmask 523264
      %v546 = vsel %vm544, %v511, 0
      %548 = vmatprep.subr.bf16.mxu0 0
      %549 = vmatpush1.bf16.msra.mxu0 %v536
      %550 = vmatprep.subr.bf16.mxu0 0
      %551 = vmatpush1.bf16.msra.mxu0 %v537
      %552 = vmatprep.subr.bf16.mxu0 0
      %553 = vmatpush1.bf16.msra.mxu0 %v538
      %554 = vmatprep.subr.bf16.mxu0 0
      %555 = vmatpush1.bf16.msra.mxu0 %v539
      %556 = vmatprep.subr.bf16.mxu0 0
      %557 = vmatpush1.bf16.msra.mxu0 0
      %558 = vmatprep.subr.bf16.mxu0 0
      %559 = vmatpush1.bf16.msra.mxu0 0
      %560 = vmatprep.subr.bf16.mxu0 0
      %561 = vmatpush1.bf16.msra.mxu0 0
      %562 = vmatprep.subr.bf16.mxu0 0
      %563 = vmatpush1.bf16.msra.mxu0 0
      %564 = vmatprep.subr.bf16.mxu0 0
      %565 = vmatpush1.bf16.msra.mxu0 0
      %566 = vmatprep.subr.bf16.mxu0 0
      %567 = vmatpush1.bf16.msra.mxu0 0
      %568 = vmatprep.subr.bf16.mxu0 0
      %569 = vmatpush1.bf16.msra.mxu0 0
      %570 = vmatprep.subr.bf16.mxu0 0
      %571 = vmatpush1.bf16.msra.mxu0 0
      %572 = vmatprep.subr.bf16.mxu0 0
      %573 = vmatpush1.bf16.msra.mxu0 0
      %574 = vmatprep.subr.bf16.mxu0 0
      %575 = vmatpush1.bf16.msra.mxu0 0
      %576 = vmatprep.subr.bf16.mxu0 0
      %577 = vmatpush1.bf16.msra.mxu0 0
      %578 = vmatprep.subr.bf16.mxu0 0
      %579 = vmatpush1.bf16.msra.mxu0 0
      %580 = vmatprep.mubr.bf16.mxu0 0
      %581 = vmatmul.mubr.bf16.gmra.mrb[0].mxu0 %v546
      %v582 = vpop.f32.mrb[0].mxu0
      %v583 = vadd.f32 0.0, %v582
      %v584 = vpop.f32.mrb[0].mxu0
      %v585 = vpop.f32.mrb[0].mxu0
      %v586 = vpop.f32.mrb[0].mxu0
      %587 = vdwg.mxu0
      %v588 = vmax.f32 %v583, 0.0
      %v589 = vld [vmem:[%s5] sm:$0x1]
      %v591 = vlaneseq
      %v592 = vshrl.u32 %v591, 7
      %v593 = vsub.s32 0, %v592
      %v594 = vrot.slane %v589, %v593
      %v596 = vmul.f32 %v588, %v594
      %v597 = vld [vmem:[%s6] sm:$0x1]
      %v599 = vlaneseq
      %v600 = vshrl.u32 %v599, 7
      %v601 = vsub.s32 0, %v600
      %v602 = vrot.slane %v597, %v601
      %v604 = vadd.f32 %v596, %v602
      %v605 = vpack.c.bf16 %v604, %v604
      %v606 = vld [vmem:[%s7] sm:$0xf]
      %v607 = vld [vmem:[%s7 + $0x4] sm:$0xf]
      %v608 = vld [vmem:[%s7 + $0x8] sm:$0xf]
      %v609 = vld [vmem:[%s7 + $0xc] sm:$0xf]
      %v610 = vld [vmem:[%s7 + $0x10] sm:$0xf]
      %v611 = vld [vmem:[%s7 + $0x14] sm:$0xf]
      %v612 = vld [vmem:[%s7 + $0x18] sm:$0xf]
      %v613 = vld [vmem:[%s7 + $0x1c] sm:$0xf]
      %v622 = vunpack.c.l.b16 %v606
      %v623 = vunpack.c.l.b16 %v607
      %v624 = vunpack.c.l.b16 %v608
      %v625 = vunpack.c.l.b16 %v609
      %v626 = vunpack.c.l.b16 %v610
      %v627 = vunpack.c.l.b16 %v611
      %v628 = vunpack.c.l.b16 %v612
      %v629 = vunpack.c.l.b16 %v613
      %v630 = vpack.c.b16 %v623, %v622
      %v631 = vpack.c.b16 %v625, %v624
      %v632 = vpack.c.b16 %v627, %v626
      %v633 = vpack.c.b16 %v629, %v628
      %v639 = vsel %vm544, %v605, 0
      %641 = vmatprep.subr.bf16.mxu0 0
      %642 = vmatpush1.bf16.msra.mxu0 %v630
      %643 = vmatprep.subr.bf16.mxu0 0
      %644 = vmatpush1.bf16.msra.mxu0 %v631
      %645 = vmatprep.subr.bf16.mxu0 0
      %646 = vmatpush1.bf16.msra.mxu0 %v632
      %647 = vmatprep.subr.bf16.mxu0 0
      %648 = vmatpush1.bf16.msra.mxu0 %v633
      %649 = vmatprep.subr.bf16.mxu0 0
      %650 = vmatpush1.bf16.msra.mxu0 0
      %651 = vmatprep.subr.bf16.mxu0 0
      %652 = vmatpush1.bf16.msra.mxu0 0
      %653 = vmatprep.subr.bf16.mxu0 0
      %654 = vmatpush1.bf16.msra.mxu0 0
      %655 = vmatprep.subr.bf16.mxu0 0
      %656 = vmatpush1.bf16.msra.mxu0 0
      %657 = vmatprep.subr.bf16.mxu0 0
      %658 = vmatpush1.bf16.msra.mxu0 0
      %659 = vmatprep.subr.bf16.mxu0 0
      %660 = vmatpush1.bf16.msra.mxu0 0
      %661 = vmatprep.subr.bf16.mxu0 0
      %662 = vmatpush1.bf16.msra.mxu0 0
      %663 = vmatprep.subr.bf16.mxu0 0
      %664 = vmatpush1.bf16.msra.mxu0 0
      %665 = vmatprep.subr.bf16.mxu0 0
      %666 = vmatpush1.bf16.msra.mxu0 0
      %667 = vmatprep.subr.bf16.mxu0 0
      %668 = vmatpush1.bf16.msra.mxu0 0
      %669 = vmatprep.subr.bf16.mxu0 0
      %670 = vmatpush1.bf16.msra.mxu0 0
      %671 = vmatprep.subr.bf16.mxu0 0
      %672 = vmatpush1.bf16.msra.mxu0 0
      %673 = vmatprep.mubr.bf16.mxu0 0
      %674 = vmatmul.mubr.bf16.gmra.mrb[0].mxu0 %v639
      %v675 = vpop.f32.mrb[0].mxu0
      %v676 = vadd.f32 0.0, %v675
      %v677 = vpop.f32.mrb[0].mxu0
      %v678 = vpop.f32.mrb[0].mxu0
      %v679 = vpop.f32.mrb[0].mxu0
      %680 = vdwg.mxu0
      %v681 = vld [vmem:[%s8] sm:$0x1]
      %v683 = vlaneseq
      %v684 = vshrl.u32 %v683, 7
      %v685 = vsub.s32 0, %v684
      %v686 = vrot.slane %v681, %v685
      %v688 = vmul.f32 %v676, %v686
      %v689 = vld [vmem:[%s9] sm:$0x1]
      %v691 = vlaneseq
      %v692 = vshrl.u32 %v691, 7
      %v693 = vsub.s32 0, %v692
      %v694 = vrot.slane %v689, %v693
      %v696 = vadd.f32 %v688, %v694
      %v697 = vmax.f32 %v696, 0.0
      %v698 = vpack.c.bf16 %v697, %v697
      %v699 = vld [vmem:[%s10] sm:$0xf]
      %v700 = vld [vmem:[%s10 + $0x4] sm:$0xf]
      %v701 = vld [vmem:[%s10 + $0x8] sm:$0xf]
      %v702 = vld [vmem:[%s10 + $0xc] sm:$0xf]
      %v703 = vld [vmem:[%s10 + $0x10] sm:$0xf]
      %v704 = vld [vmem:[%s10 + $0x14] sm:$0xf]
      %v705 = vld [vmem:[%s10 + $0x18] sm:$0xf]
      %v706 = vld [vmem:[%s10 + $0x1c] sm:$0xf]
      %v707 = vld [vmem:[%s10 + $0x20] sm:$0xf]
      %v708 = vld [vmem:[%s10 + $0x24] sm:$0xf]
      %v709 = vld [vmem:[%s10 + $0x28] sm:$0xf]
      %v710 = vld [vmem:[%s10 + $0x2c] sm:$0xf]
      %v711 = vld [vmem:[%s10 + $0x30] sm:$0xf]
      %v712 = vld [vmem:[%s10 + $0x34] sm:$0xf]
      %v713 = vld [vmem:[%s10 + $0x38] sm:$0xf]
      %v714 = vld [vmem:[%s10 + $0x3c] sm:$0xf]
      %v731 = vunpack.c.l.b16 %v699
      %v732 = vunpack.c.l.b16 %v700
      %v733 = vunpack.c.l.b16 %v701
      %v734 = vunpack.c.l.b16 %v702
      %v735 = vunpack.c.l.b16 %v703
      %v736 = vunpack.c.l.b16 %v704
      %v737 = vunpack.c.l.b16 %v705
      %v738 = vunpack.c.l.b16 %v706
      %v739 = vunpack.c.l.b16 %v707
      %v740 = vunpack.c.l.b16 %v708
      %v741 = vunpack.c.l.b16 %v709
      %v742 = vunpack.c.l.b16 %v710
      %v743 = vunpack.c.l.b16 %v711
      %v744 = vunpack.c.l.b16 %v712
      %v745 = vunpack.c.l.b16 %v713
      %v746 = vunpack.c.l.b16 %v714
      %v747 = vpack.c.b16 %v732, %v731
      %v748 = vpack.c.b16 %v734, %v733
      %v749 = vpack.c.b16 %v736, %v735
      %v750 = vpack.c.b16 %v738, %v737
      %v751 = vpack.c.b16 %v740, %v739
      %v752 = vpack.c.b16 %v742, %v741
      %v753 = vpack.c.b16 %v744, %v743
      %v754 = vpack.c.b16 %v746, %v745
      %763 = vmatprep.subr.bf16.mxu0 0
      %764 = vmatpush1.bf16.msra.mxu0 %v747
      %765 = vmatprep.subr.bf16.mxu0 0
      %766 = vmatpush1.bf16.msra.mxu0 %v748
      %767 = vmatprep.subr.bf16.mxu0 0
      %768 = vmatpush1.bf16.msra.mxu0 %v749
      %769 = vmatprep.subr.bf16.mxu0 0
      %770 = vmatpush1.bf16.msra.mxu0 %v750
      %771 = vmatprep.subr.bf16.mxu0 0
      %772 = vmatpush1.bf16.msra.mxu0 %v751
      %773 = vmatprep.subr.bf16.mxu0 0
      %774 = vmatpush1.bf16.msra.mxu0 %v752
      %775 = vmatprep.subr.bf16.mxu0 0
      %776 = vmatpush1.bf16.msra.mxu0 %v753
      %777 = vmatprep.subr.bf16.mxu0 0
      %778 = vmatpush1.bf16.msra.mxu0 %v754
      %779 = vmatprep.subr.bf16.mxu0 0
      %780 = vmatpush1.bf16.msra.mxu0 0
      %781 = vmatprep.subr.bf16.mxu0 0
      %782 = vmatpush1.bf16.msra.mxu0 0
      %783 = vmatprep.subr.bf16.mxu0 0
      %784 = vmatpush1.bf16.msra.mxu0 0
      %785 = vmatprep.subr.bf16.mxu0 0
      %786 = vmatpush1.bf16.msra.mxu0 0
      %787 = vmatprep.subr.bf16.mxu0 0
      %788 = vmatpush1.bf16.msra.mxu0 0
      %789 = vmatprep.subr.bf16.mxu0 0
      %790 = vmatpush1.bf16.msra.mxu0 0
      %791 = vmatprep.subr.bf16.mxu0 0
      %792 = vmatpush1.bf16.msra.mxu0 0
      %793 = vmatprep.subr.bf16.mxu0 0
      %794 = vmatpush1.bf16.msra.mxu0 0
      %795 = vmatprep.mubr.bf16.mxu0 0
      %796 = vmatmul.mubr.bf16.gmra.mrb[0].mxu0 %v698
      %v797 = vpop.f32.mrb[0].mxu0
      %v798 = vadd.f32 0.0, %v797
      %v799 = vpop.f32.mrb[0].mxu0
      %v800 = vpop.f32.mrb[0].mxu0
      %v801 = vpop.f32.mrb[0].mxu0
      %802 = vdwg.mxu0
      %v803 = vld [vmem:[%s11] sm:$0x1]
      %v805 = vlaneseq
      %v806 = vshrl.u32 %v805, 7
      %v807 = vsub.s32 0, %v806
      %v808 = vrot.slane %v803, %v807
      %v810 = vmul.f32 %v798, %v808
      %v811 = vld [vmem:[%s12] sm:$0x1]
      %v813 = vlaneseq
      %v814 = vshrl.u32 %v813, 7
      %v815 = vsub.s32 0, %v814
      %v816 = vrot.slane %v811, %v815
      %v818 = vadd.f32 %v810, %v816
      %v819 = vmax.f32 %v818, 0.0
      %820 = vst [vmem:[%s435] sm:$0xff] %v819
      %p821 = scmp.lt.s32.totalorder %s24, 1
      %s822 = scalar_select %p821, %s24, 1
      %s823 = smul.addr %s822, 8
      %s824 = scalar_lea.vmem %s13, %s823
      // Predicated region
      $region73: #{conv_transformer_forward.4} parent=71 // pred_check
        %p825 = pneg %p320
      $region74: #{conv_transformer_forward.4} parent=71 // pred_check_branch
        %827 = sbr.rel (%p825) target = $region76
      $region75: #{conv_transformer_forward.4} parent=71 // pred_region
        _
      $region76: #{conv_transformer_forward.4} parent=71 // pred_fallthru
        _
    $region72: #{conv_transformer_forward.4} parent=5 // pred_fallthru
      _
    %p828 = scmp.le.s32.totalorder 2, %s19
    // Predicated region
    $region77: #{conv_transformer_forward.4} parent=5 // pred_check
      %p829 = pneg %p828
    $region78: #{conv_transformer_forward.4} parent=5 // pred_check_branch
      %831 = sbr.rel (%p829) target = $region80
    $region79: #{conv_transformer_forward.4} parent=5 // pred_region
      %s832 = ssub.s32 %s19, 2
      // Predicated region
      $region81: #{conv_transformer_forward.4} parent=79 // pred_check
        %p833 = pneg %p326
      $region82: #{conv_transformer_forward.4} parent=79 // pred_check_branch
        %835 = sbr.rel (%p833) target = $region84
      $region83: #{conv_transformer_forward.4} parent=79 // pred_region
        %p836 = scmp.lt.s32.totalorder %s25, 1
        %s837 = scalar_select %p836, %s25, 1
        %s838 = smul.addr %s837, 8
        %s839 = scalar_lea.vmem %s13, %s838
      $region84: #{conv_transformer_forward.4} parent=79 // pred_fallthru
        _
    $region80: #{conv_transformer_forward.4} parent=5 // pred_fallthru
      _
  $region6: #{conv_transformer_forward.4} parent=0 // loop_footer
    %s23 = sadd.s32 1, %s19
  $region7: #{conv_transformer_forward.4} parent=0 // loop_footer_branch
    %18 = sbr.rel target = $region3
  $region8: #{conv_transformer_forward.4} parent=0 // loop_exit
    _

// kernel: conv_transformer_forward.5
$region0: #{conv_transformer_forward.5}
  #allocation0 [shape = 'u32[]', space=smem, size = 0x4, offset = 0x4, fixed_abs, tag = 'smem constant byte address 0x4 - core index']
  #allocation1 [shape = 'u32[144,128]{1,0:T(1,128)}', space=vmem, size = 0x12000, scoped, tag = 'internal scratch']
  %s0 = inlined_call_operand.vmem [shape: f32[16,128], index: 0, kind: input, shape index: {}]
  %s1 = inlined_call_operand.vmem [shape: f32[1,128], index: 1, kind: input, shape index: {}]
  %s2 = inlined_call_operand.vmem [shape: f32[1,128], index: 2, kind: input, shape index: {}]
  %s3 = inlined_call_operand.vmem [shape: bf16[128,384], index: 3, kind: input, shape index: {}]
  %s4 = inlined_call_operand.vmem [shape: f32[1,384], index: 4, kind: input, shape index: {}]
  %s5 = inlined_call_operand.vmem [shape: bf16[128,128], index: 5, kind: input, shape index: {}]
  %s6 = inlined_call_operand.vmem [shape: f32[1,128], index: 6, kind: input, shape index: {}]
  %s7 = inlined_call_operand.vmem [shape: f32[1,128], index: 7, kind: input, shape index: {}]
  %s8 = inlined_call_operand.vmem [shape: f32[1,128], index: 8, kind: input, shape index: {}]
  %s9 = inlined_call_operand.vmem [shape: bf16[128,32], index: 9, kind: input, shape index: {}]
  %s10 = inlined_call_operand.vmem [shape: f32[1,32], index: 10, kind: input, shape index: {}]
  %s11 = inlined_call_operand.vmem [shape: bf16[32,128], index: 11, kind: input, shape index: {}]
  %s12 = inlined_call_operand.vmem [shape: f32[1,128], index: 12, kind: input, shape index: {}]
  %s13 = inlined_call_operand.vmem [shape: f32[16,128], index: 13, kind: output, shape index: {}]
  %s14 = sld [smem:[#allocation0]]
  $region85: #{conv_transformer_forward.5} parent=0
    _
  %s16 = ssub.s32 1, %s14
  %s17 = scalar_select 0, %s16, %s14
  loop: start=0, step=1, limit=4
  $region2: #{conv_transformer_forward.5} parent=0 // loop_pre_header
    _
  $region3: #{conv_transformer_forward.5} parent=0 // loop_header
    %s19 = sphi 0, %s23
    %p20 = scmp.ge.s32.totalorder %s19, 4
    %s29 = sphi 0, %s31
    %s32 = sphi 0, %s29
    %s33 = sphi 0, %s32
    %s49 = sphi 0, %s33
    %s53 = sphi 0, %s53
    %s55 = sphi 0, %s53
    %s56 = sphi 0, %s55
    %s70 = sphi 0, %s56
    %s74 = sphi 0, %s74
    %s76 = sphi 0, %s74
    %s77 = sphi 0, %s76
    %s91 = sphi 0, %s77
    %s95 = sphi 0, %s95
    %s97 = sphi 0, %s95
    %s98 = sphi 0, %s97
    %s112 = sphi 0, %s98
    %s116 = sphi 0, %s116
    %s118 = sphi 0, %s116
    %s119 = sphi 0, %s118
    %s133 = sphi 0, %s119
    %s137 = sphi 0, %s137
    %s139 = sphi 0, %s137
    %s140 = sphi 0, %s139
    %s154 = sphi 0, %s140
    %s158 = sphi 0, %s158
    %s160 = sphi 0, %s158
    %s161 = sphi 0, %s160
    %s175 = sphi 0, %s161
    %s179 = sphi 0, %s179
    %s181 = sphi 0, %s179
    %s182 = sphi 0, %s181
    %s196 = sphi 0, %s182
    %s200 = sphi 0, %s200
    %s202 = sphi 0, %s200
    %s203 = sphi 0, %s202
    %s217 = sphi 0, %s203
    %s221 = sphi 0, %s221
    %s223 = sphi 0, %s221
    %s224 = sphi 0, %s223
    %s238 = sphi 0, %s224
    %s242 = sphi 0, %s242
    %s244 = sphi 0, %s242
    %s245 = sphi 0, %s244
    %s259 = sphi 0, %s245
    %s263 = sphi 0, %s263
    %s265 = sphi 0, %s263
    %s266 = sphi 0, %s265
    %s280 = sphi 0, %s266
    %s284 = sphi 0, %s284
    %s286 = sphi 0, %s284
    %s287 = sphi 0, %s286
    %s301 = sphi 0, %s287
    %s307 = sphi 0, %s309
    %s310 = sphi 0, %s307
    %s311 = sphi 0, %s310
    %s327 = sphi 0, %s311
  $region4: #{conv_transformer_forward.5} parent=0 // loop_header_branch
    %22 = sbr.rel (%p20) target = $region8
  $region5: #{conv_transformer_forward.5} parent=0 // loop_body
    %s24 = ssub.s32 %s19, 1
    %s25 = ssub.s32 %s19, 2
    %s26 = sadd.s32 %s19, 1
    %s27 = ssub.s32 %s19, %s26
    %p28 = scmp.eq.s32.totalorder %s27, 0
    %s30 = sadd.s32 %s29, 1
    %s31 = scalar_select %p28, %s29, %s30
    %p34 = pneg %p28
    %p35 = scmp.eq.s32.totalorder %s19, 1
    %p36 = por %p34, %p35
    %p37 = scmp.ne.s32.totalorder %s29, %s32
    %p38 = scmp.eq.s32.totalorder %s19, 0
    %p39 = por %p37, %p38
    %p40 = scmp.ne.s32.totalorder %s29, %s32
    %p41 = scmp.eq.s32.totalorder %s24, 1
    %p42 = por %p40, %p41
    %p43 = scmp.ne.s32.totalorder %s32, %s33
    %p44 = scmp.eq.s32.totalorder %s24, 0
    %p45 = por %p43, %p44
    %p46 = scmp.ne.s32.totalorder %s32, %s33
    %p47 = scmp.eq.s32.totalorder %s25, 1
    %p48 = por %p46, %p47
    %p50 = scmp.ne.s32.totalorder %s33, %s49
    %p51 = scmp.eq.s32.totalorder %s25, 0
    %p52 = por %p50, %p51
    %s54 = sadd.s32 %s53, 1
    %p57 = scmp.eq.s32.totalorder %s19, 1
    %p58 = scmp.ne.s32.totalorder %s53, %s55
    %p59 = scmp.eq.s32.totalorder %s19, 0
    %p60 = por %p58, %p59
    %p61 = scmp.ne.s32.totalorder %s53, %s55
    %p62 = scmp.eq.s32.totalorder %s24, 1
    %p63 = por %p61, %p62
    %p64 = scmp.ne.s32.totalorder %s55, %s56
    %p65 = scmp.eq.s32.totalorder %s24, 0
    %p66 = por %p64, %p65
    %p67 = scmp.ne.s32.totalorder %s55, %s56
    %p68 = scmp.eq.s32.totalorder %s25, 1
    %p69 = por %p67, %p68
    %p71 = scmp.ne.s32.totalorder %s56, %s70
    %p72 = scmp.eq.s32.totalorder %s25, 0
    %p73 = por %p71, %p72
    %s75 = sadd.s32 %s74, 1
    %p78 = scmp.eq.s32.totalorder %s19, 1
    %p79 = scmp.ne.s32.totalorder %s74, %s76
    %p80 = scmp.eq.s32.totalorder %s19, 0
    %p81 = por %p79, %p80
    %p82 = scmp.ne.s32.totalorder %s74, %s76
    %p83 = scmp.eq.s32.totalorder %s24, 1
    %p84 = por %p82, %p83
    %p85 = scmp.ne.s32.totalorder %s76, %s77
    %p86 = scmp.eq.s32.totalorder %s24, 0
    %p87 = por %p85, %p86
    %p88 = scmp.ne.s32.totalorder %s76, %s77
    %p89 = scmp.eq.s32.totalorder %s25, 1
    %p90 = por %p88, %p89
    %p92 = scmp.ne.s32.totalorder %s77, %s91
    %p93 = scmp.eq.s32.totalorder %s25, 0
    %p94 = por %p92, %p93
    %s96 = sadd.s32 %s95, 1
    %p99 = scmp.eq.s32.totalorder %s19, 1
    %p100 = scmp.ne.s32.totalorder %s95, %s97
    %p101 = scmp.eq.s32.totalorder %s19, 0
    %p102 = por %p100, %p101
    %p103 = scmp.ne.s32.totalorder %s95, %s97
    %p104 = scmp.eq.s32.totalorder %s24, 1
    %p105 = por %p103, %p104
    %p106 = scmp.ne.s32.totalorder %s97, %s98
    %p107 = scmp.eq.s32.totalorder %s24, 0
    %p108 = por %p106, %p107
    %p109 = scmp.ne.s32.totalorder %s97, %s98
    %p110 = scmp.eq.s32.totalorder %s25, 1
    %p111 = por %p109, %p110
    %p113 = scmp.ne.s32.totalorder %s98, %s112
    %p114 = scmp.eq.s32.totalorder %s25, 0
    %p115 = por %p113, %p114
    %s117 = sadd.s32 %s116, 1
    %p120 = scmp.eq.s32.totalorder %s19, 1
    %p121 = scmp.ne.s32.totalorder %s116, %s118
    %p122 = scmp.eq.s32.totalorder %s19, 0
    %p123 = por %p121, %p122
    %p124 = scmp.ne.s32.totalorder %s116, %s118
    %p125 = scmp.eq.s32.totalorder %s24, 1
    %p126 = por %p124, %p125
    %p127 = scmp.ne.s32.totalorder %s118, %s119
    %p128 = scmp.eq.s32.totalorder %s24, 0
    %p129 = por %p127, %p128
    %p130 = scmp.ne.s32.totalorder %s118, %s119
    %p131 = scmp.eq.s32.totalorder %s25, 1
    %p132 = por %p130, %p131
    %p134 = scmp.ne.s32.totalorder %s119, %s133
    %p135 = scmp.eq.s32.totalorder %s25, 0
    %p136 = por %p134, %p135
    %s138 = sadd.s32 %s137, 1
    %p141 = scmp.eq.s32.totalorder %s19, 1
    %p142 = scmp.ne.s32.totalorder %s137, %s139
    %p143 = scmp.eq.s32.totalorder %s19, 0
    %p144 = por %p142, %p143
    %p145 = scmp.ne.s32.totalorder %s137, %s139
    %p146 = scmp.eq.s32.totalorder %s24, 1
    %p147 = por %p145, %p146
    %p148 = scmp.ne.s32.totalorder %s139, %s140
    %p149 = scmp.eq.s32.totalorder %s24, 0
    %p150 = por %p148, %p149
    %p151 = scmp.ne.s32.totalorder %s139, %s140
    %p152 = scmp.eq.s32.totalorder %s25, 1
    %p153 = por %p151, %p152
    %p155 = scmp.ne.s32.totalorder %s140, %s154
    %p156 = scmp.eq.s32.totalorder %s25, 0
    %p157 = por %p155, %p156
    %s159 = sadd.s32 %s158, 1
    %p162 = scmp.eq.s32.totalorder %s19, 1
    %p163 = scmp.ne.s32.totalorder %s158, %s160
    %p164 = scmp.eq.s32.totalorder %s19, 0
    %p165 = por %p163, %p164
    %p166 = scmp.ne.s32.totalorder %s158, %s160
    %p167 = scmp.eq.s32.totalorder %s24, 1
    %p168 = por %p166, %p167
    %p169 = scmp.ne.s32.totalorder %s160, %s161
    %p170 = scmp.eq.s32.totalorder %s24, 0
    %p171 = por %p169, %p170
    %p172 = scmp.ne.s32.totalorder %s160, %s161
    %p173 = scmp.eq.s32.totalorder %s25, 1
    %p174 = por %p172, %p173
    %p176 = scmp.ne.s32.totalorder %s161, %s175
    %p177 = scmp.eq.s32.totalorder %s25, 0
    %p178 = por %p176, %p177
    %s180 = sadd.s32 %s179, 1
    %p183 = scmp.eq.s32.totalorder %s19, 1
    %p184 = scmp.ne.s32.totalorder %s179, %s181
    %p185 = scmp.eq.s32.totalorder %s19, 0
    %p186 = por %p184, %p185
    %p187 = scmp.ne.s32.totalorder %s179, %s181
    %p188 = scmp.eq.s32.totalorder %s24, 1
    %p189 = por %p187, %p188
    %p190 = scmp.ne.s32.totalorder %s181, %s182
    %p191 = scmp.eq.s32.totalorder %s24, 0
    %p192 = por %p190, %p191
    %p193 = scmp.ne.s32.totalorder %s181, %s182
    %p194 = scmp.eq.s32.totalorder %s25, 1
    %p195 = por %p193, %p194
    %p197 = scmp.ne.s32.totalorder %s182, %s196
    %p198 = scmp.eq.s32.totalorder %s25, 0
    %p199 = por %p197, %p198
    %s201 = sadd.s32 %s200, 1
    %p204 = scmp.eq.s32.totalorder %s19, 1
    %p205 = scmp.ne.s32.totalorder %s200, %s202
    %p206 = scmp.eq.s32.totalorder %s19, 0
    %p207 = por %p205, %p206
    %p208 = scmp.ne.s32.totalorder %s200, %s202
    %p209 = scmp.eq.s32.totalorder %s24, 1
    %p210 = por %p208, %p209
    %p211 = scmp.ne.s32.totalorder %s202, %s203
    %p212 = scmp.eq.s32.totalorder %s24, 0
    %p213 = por %p211, %p212
    %p214 = scmp.ne.s32.totalorder %s202, %s203
    %p215 = scmp.eq.s32.totalorder %s25, 1
    %p216 = por %p214, %p215
    %p218 = scmp.ne.s32.totalorder %s203, %s217
    %p219 = scmp.eq.s32.totalorder %s25, 0
    %p220 = por %p218, %p219
    %s222 = sadd.s32 %s221, 1
    %p225 = scmp.eq.s32.totalorder %s19, 1
    %p226 = scmp.ne.s32.totalorder %s221, %s223
    %p227 = scmp.eq.s32.totalorder %s19, 0
    %p228 = por %p226, %p227
    %p229 = scmp.ne.s32.totalorder %s221, %s223
    %p230 = scmp.eq.s32.totalorder %s24, 1
    %p231 = por %p229, %p230
    %p232 = scmp.ne.s32.totalorder %s223, %s224
    %p233 = scmp.eq.s32.totalorder %s24, 0
    %p234 = por %p232, %p233
    %p235 = scmp.ne.s32.totalorder %s223, %s224
    %p236 = scmp.eq.s32.totalorder %s25, 1
    %p237 = por %p235, %p236
    %p239 = scmp.ne.s32.totalorder %s224, %s238
    %p240 = scmp.eq.s32.totalorder %s25, 0
    %p241 = por %p239, %p240
    %s243 = sadd.s32 %s242, 1
    %p246 = scmp.eq.s32.totalorder %s19, 1
    %p247 = scmp.ne.s32.totalorder %s242, %s244
    %p248 = scmp.eq.s32.totalorder %s19, 0
    %p249 = por %p247, %p248
    %p250 = scmp.ne.s32.totalorder %s242, %s244
    %p251 = scmp.eq.s32.totalorder %s24, 1
    %p252 = por %p250, %p251
    %p253 = scmp.ne.s32.totalorder %s244, %s245
    %p254 = scmp.eq.s32.totalorder %s24, 0
    %p255 = por %p253, %p254
    %p256 = scmp.ne.s32.totalorder %s244, %s245
    %p257 = scmp.eq.s32.totalorder %s25, 1
    %p258 = por %p256, %p257
    %p260 = scmp.ne.s32.totalorder %s245, %s259
    %p261 = scmp.eq.s32.totalorder %s25, 0
    %p262 = por %p260, %p261
    %s264 = sadd.s32 %s263, 1
    %p267 = scmp.eq.s32.totalorder %s19, 1
    %p268 = scmp.ne.s32.totalorder %s263, %s265
    %p269 = scmp.eq.s32.totalorder %s19, 0
    %p270 = por %p268, %p269
    %p271 = scmp.ne.s32.totalorder %s263, %s265
    %p272 = scmp.eq.s32.totalorder %s24, 1
    %p273 = por %p271, %p272
    %p274 = scmp.ne.s32.totalorder %s265, %s266
    %p275 = scmp.eq.s32.totalorder %s24, 0
    %p276 = por %p274, %p275
    %p277 = scmp.ne.s32.totalorder %s265, %s266
    %p278 = scmp.eq.s32.totalorder %s25, 1
    %p279 = por %p277, %p278
    %p281 = scmp.ne.s32.totalorder %s266, %s280
    %p282 = scmp.eq.s32.totalorder %s25, 0
    %p283 = por %p281, %p282
    %s285 = sadd.s32 %s284, 1
    %p288 = scmp.eq.s32.totalorder %s19, 1
    %p289 = scmp.ne.s32.totalorder %s284, %s286
    %p290 = scmp.eq.s32.totalorder %s19, 0
    %p291 = por %p289, %p290
    %p292 = scmp.ne.s32.totalorder %s284, %s286
    %p293 = scmp.eq.s32.totalorder %s24, 1
    %p294 = por %p292, %p293
    %p295 = scmp.ne.s32.totalorder %s286, %s287
    %p296 = scmp.eq.s32.totalorder %s24, 0
    %p297 = por %p295, %p296
    %p298 = scmp.ne.s32.totalorder %s286, %s287
    %p299 = scmp.eq.s32.totalorder %s25, 1
    %p300 = por %p298, %p299
    %p302 = scmp.ne.s32.totalorder %s287, %s301
    %p303 = scmp.eq.s32.totalorder %s25, 0
    %p304 = por %p302, %p303
    %s305 = ssub.s32 %s19, %s26
    %p306 = scmp.eq.s32.totalorder %s305, 0
    %s308 = sadd.s32 %s307, 1
    %s309 = scalar_select %p306, %s307, %s308
    %p312 = pneg %p306
    %p313 = scmp.eq.s32.totalorder %s19, 1
    %p314 = por %p312, %p313
    %p315 = scmp.ne.s32.totalorder %s307, %s310
    %p316 = scmp.eq.s32.totalorder %s19, 0
    %p317 = por %p315, %p316
    %p318 = scmp.ne.s32.totalorder %s307, %s310
    %p319 = scmp.eq.s32.totalorder %s24, 1
    %p320 = por %p318, %p319
    %p321 = scmp.ne.s32.totalorder %s310, %s311
    %p322 = scmp.eq.s32.totalorder %s24, 0
    %p323 = por %p321, %p322
    %p324 = scmp.ne.s32.totalorder %s310, %s311
    %p325 = scmp.eq.s32.totalorder %s25, 1
    %p326 = por %p324, %p325
    %p328 = scmp.ne.s32.totalorder %s311, %s327
    %p329 = scmp.eq.s32.totalorder %s25, 0
    %p330 = por %p328, %p329
    %p331 = scmp.le.s32.totalorder 1, %s19
    %p332 = scmp.lt.s32.totalorder %s19, 3
    %p333 = pnand %p331, %p332
    %p334 = pneg %p333
    // Predicated region
    $region9: #{conv_transformer_forward.5} parent=5 // pred_check
      _
    $region10: #{conv_transformer_forward.5} parent=5 // pred_check_branch
      %336 = sbr.rel (%p333) target = $region12
    $region11: #{conv_transformer_forward.5} parent=5 // pred_region
      %s337 = ssub.s32 %s19, 1
      // Predicated region
      $region13: #{conv_transformer_forward.5} parent=11 // pred_check
        %p338 = pneg %p66
      $region14: #{conv_transformer_forward.5} parent=11 // pred_check_branch
        %340 = sbr.rel (%p338) target = $region16
      $region15: #{conv_transformer_forward.5} parent=11 // pred_region
        _
      $region16: #{conv_transformer_forward.5} parent=11 // pred_fallthru
        _
      // Predicated region
      $region17: #{conv_transformer_forward.5} parent=11 // pred_check
        %p341 = pneg %p87
      $region18: #{conv_transformer_forward.5} parent=11 // pred_check_branch
        %343 = sbr.rel (%p341) target = $region20
      $region19: #{conv_transformer_forward.5} parent=11 // pred_region
        _
      $region20: #{conv_transformer_forward.5} parent=11 // pred_fallthru
        _
      // Predicated region
      $region21: #{conv_transformer_forward.5} parent=11 // pred_check
        %p344 = pneg %p108
      $region22: #{conv_transformer_forward.5} parent=11 // pred_check_branch
        %346 = sbr.rel (%p344) target = $region24
      $region23: #{conv_transformer_forward.5} parent=11 // pred_region
        _
      $region24: #{conv_transformer_forward.5} parent=11 // pred_fallthru
        _
      // Predicated region
      $region25: #{conv_transformer_forward.5} parent=11 // pred_check
        %p347 = pneg %p129
      $region26: #{conv_transformer_forward.5} parent=11 // pred_check_branch
        %349 = sbr.rel (%p347) target = $region28
      $region27: #{conv_transformer_forward.5} parent=11 // pred_region
        _
      $region28: #{conv_transformer_forward.5} parent=11 // pred_fallthru
        _
      // Predicated region
      $region29: #{conv_transformer_forward.5} parent=11 // pred_check
        %p350 = pneg %p150
      $region30: #{conv_transformer_forward.5} parent=11 // pred_check_branch
        %352 = sbr.rel (%p350) target = $region32
      $region31: #{conv_transformer_forward.5} parent=11 // pred_region
        _
      $region32: #{conv_transformer_forward.5} parent=11 // pred_fallthru
        _
      // Predicated region
      $region33: #{conv_transformer_forward.5} parent=11 // pred_check
        %p353 = pneg %p171
      $region34: #{conv_transformer_forward.5} parent=11 // pred_check_branch
        %355 = sbr.rel (%p353) target = $region36
      $region35: #{conv_transformer_forward.5} parent=11 // pred_region
        _
      $region36: #{conv_transformer_forward.5} parent=11 // pred_fallthru
        _
      // Predicated region
      $region37: #{conv_transformer_forward.5} parent=11 // pred_check
        %p356 = pneg %p192
      $region38: #{conv_transformer_forward.5} parent=11 // pred_check_branch
        %358 = sbr.rel (%p356) target = $region40
      $region39: #{conv_transformer_forward.5} parent=11 // pred_region
        _
      $region40: #{conv_transformer_forward.5} parent=11 // pred_fallthru
        _
      // Predicated region
      $region41: #{conv_transformer_forward.5} parent=11 // pred_check
        %p359 = pneg %p213
      $region42: #{conv_transformer_forward.5} parent=11 // pred_check_branch
        %361 = sbr.rel (%p359) target = $region44
      $region43: #{conv_transformer_forward.5} parent=11 // pred_region
        _
      $region44: #{conv_transformer_forward.5} parent=11 // pred_fallthru
        _
      // Predicated region
      $region45: #{conv_transformer_forward.5} parent=11 // pred_check
        %p362 = pneg %p234
      $region46: #{conv_transformer_forward.5} parent=11 // pred_check_branch
        %364 = sbr.rel (%p362) target = $region48
      $region47: #{conv_transformer_forward.5} parent=11 // pred_region
        _
      $region48: #{conv_transformer_forward.5} parent=11 // pred_fallthru
        _
      // Predicated region
      $region49: #{conv_transformer_forward.5} parent=11 // pred_check
        %p365 = pneg %p255
      $region50: #{conv_transformer_forward.5} parent=11 // pred_check_branch
        %367 = sbr.rel (%p365) target = $region52
      $region51: #{conv_transformer_forward.5} parent=11 // pred_region
        _
      $region52: #{conv_transformer_forward.5} parent=11 // pred_fallthru
        _
      // Predicated region
      $region53: #{conv_transformer_forward.5} parent=11 // pred_check
        %p368 = pneg %p276
      $region54: #{conv_transformer_forward.5} parent=11 // pred_check_branch
        %370 = sbr.rel (%p368) target = $region56
      $region55: #{conv_transformer_forward.5} parent=11 // pred_region
        _
      $region56: #{conv_transformer_forward.5} parent=11 // pred_fallthru
        _
      // Predicated region
      $region57: #{conv_transformer_forward.5} parent=11 // pred_check
        %p371 = pneg %p297
      $region58: #{conv_transformer_forward.5} parent=11 // pred_check_branch
        %373 = sbr.rel (%p371) target = $region60
      $region59: #{conv_transformer_forward.5} parent=11 // pred_region
        _
      $region60: #{conv_transformer_forward.5} parent=11 // pred_fallthru
        _
    $region12: #{conv_transformer_forward.5} parent=5 // pred_fallthru
      _
    %p374 = scmp.lt.s32.totalorder %s19, 2
    // Predicated region
    $region61: #{conv_transformer_forward.5} parent=5 // pred_check
      %p375 = pneg %p374
    $region62: #{conv_transformer_forward.5} parent=5 // pred_check_branch
      %377 = sbr.rel (%p375) target = $region64
    $region63: #{conv_transformer_forward.5} parent=5 // pred_region
      // Predicated region
      $region65: #{conv_transformer_forward.5} parent=63 // pred_check
        %p378 = pneg %p39
      $region66: #{conv_transformer_forward.5} parent=63 // pred_check_branch
        %380 = sbr.rel (%p378) target = $region68
      $region67: #{conv_transformer_forward.5} parent=63 // pred_region
        %p381 = scmp.lt.s32.totalorder %s19, 1
        %s382 = scalar_select %p381, %s19, 1
        %s383 = smul.addr %s382, 8
        %s384 = scalar_lea.vmem %s0, %s383
      $region68: #{conv_transformer_forward.5} parent=63 // pred_fallthru
        _
    $region64: #{conv_transformer_forward.5} parent=5 // pred_fallthru
      _
    %p385 = scmp.le.s32.totalorder 1, %s19
    %p386 = scmp.lt.s32.totalorder %s19, 3
    %p387 = pnand %p385, %p386
    %p388 = pneg %p387
    // Predicated region
    $region69: #{conv_transformer_forward.5} parent=5 // pred_check
      _
    $region70: #{conv_transformer_forward.5} parent=5 // pred_check_branch
      %390 = sbr.rel (%p387) target = $region72
    $region71: #{conv_transformer_forward.5} parent=5 // pred_region
      %s391 = ssub.s32 %s19, 1
      %p392 = scmp.lt.s32.totalorder %s24, 1
      %s393 = scalar_select %p392, %s24, 1
      %s394 = smul.addr %s393, 8
      %s395 = scalar_lea.vmem %s0, %s394
      %p396 = pneg %p45
      %p397 = pneg %p42
      %p398 = pneg %p66
      %p399 = pneg %p63
      %p400 = pneg %p87
      %p401 = pneg %p84
      %p402 = pneg %p108
      %p403 = pneg %p105
      %p404 = pneg %p129
      %p405 = pneg %p126
      %p406 = pneg %p150
      %p407 = pneg %p147
      %p408 = pneg %p171
      %p409 = pneg %p168
      %p410 = pneg %p192
      %p411 = pneg %p189
      %p412 = pneg %p213
      %p413 = pneg %p210
      %p414 = pneg %p234
      %p415 = pneg %p231
      %p416 = pneg %p255
      %p417 = pneg %p252
      %p418 = pneg %p276
      %p419 = pneg %p273
      %p420 = pneg %p297
      %p421 = pneg %p294
      %p422 = pneg %p323
      %p423 = pneg %p320
      %p424 = scmp.lt.s32.totalorder %s24, 1
      %s425 = scalar_select %p424, %s24, 1
      %s426 = smul.addr %s425, 8
      %s427 = scalar_lea.vmem %s13, %s426
      %p428 = scmp.lt.s32.totalorder %s24, 1
      %s429 = scalar_select %p428, %s24, 1
      %s430 = smul.addr %s429, 8
      %s431 = scalar_lea.vmem %s0, %s430
      %p432 = scmp.lt.s32.totalorder %s24, 1
      %s433 = scalar_select %p432, %s24, 1
      %s434 = smul.addr %s433, 8
      %s435 = scalar_lea.vmem %s13, %s434
      %v437 = vld [vmem:[%s431] sm:$0xff]
      %438 = vadd.xlane.f32.xlu0 %v437
      %v439 = vpop.xlane.xlu0 %438
      %v440 = vrcp.pop 128.0
      %v441 = vmul.f32 %v439, %v440
      %v442 = vsub.f32 %v437, %v441
      %v443 = vmul.f32 %v442, %v442
      %444 = vadd.xlane.f32.xlu0 %v443
      %v445 = vpop.xlane.xlu0 %444
      %v446 = vmul.f32 %v445, %v440
      %v447 = vadd.f32 %v446, 1e-05
      %v448 = vrsqrt.pop %v447
      %v449 = vmul.f32 %v442, %v448
      %v450 = vld [vmem:[%s1] sm:$0x1]
      %v452 = vlaneseq
      %v453 = vshrl.u32 %v452, 7
      %v454 = vsub.s32 0, %v453
      %v455 = vrot.slane %v450, %v454
      %v457 = vmul.f32 %v449, %v455
      %v458 = vld [vmem:[%s2] sm:$0x1]
      %v460 = vlaneseq
      %v461 = vshrl.u32 %v460, 7
      %v462 = vsub.s32 0, %v461
      %v463 = vrot.slane %v458, %v462
      %v465 = vadd.f32 %v457, %v463
      %v466 = vpack.c.bf16 %v465, %v465
      %v467 = vld [vmem:[%s3] sm:$0xff]
      %v468 = vld [vmem:[%s3 + $0x8] sm:$0xf]
      %v469 = vld [vmem:[%s3 + $0xc] sm:$0xff]
      %v470 = vld [vmem:[%s3 + $0x14] sm:$0xf]
      %v471 = vld [vmem:[%s3 + $0x18] sm:$0xff]
      %v472 = vld [vmem:[%s3 + $0x20] sm:$0xf]
      %v473 = vld [vmem:[%s3 + $0x24] sm:$0xff]
      %v474 = vld [vmem:[%s3 + $0x2c] sm:$0xf]
      %v475 = vld [vmem:[%s3 + $0x30] sm:$0xff]
      %v476 = vld [vmem:[%s3 + $0x38] sm:$0xf]
      %v477 = vld [vmem:[%s3 + $0x3c] sm:$0xff]
      %v478 = vld [vmem:[%s3 + $0x44] sm:$0xf]
      %v479 = vld [vmem:[%s3 + $0x48] sm:$0xff]
      %v480 = vld [vmem:[%s3 + $0x50] sm:$0xf]
      %v481 = vld [vmem:[%s3 + $0x54] sm:$0xff]
      %v482 = vld [vmem:[%s3 + $0x5c] sm:$0xf]
      %v483 = vld [vmem:[%s3 + $0x60] sm:$0xff]
      %v484 = vld [vmem:[%s3 + $0x68] sm:$0xf]
      %v485 = vld [vmem:[%s3 + $0x6c] sm:$0xff]
      %v486 = vld [vmem:[%s3 + $0x74] sm:$0xf]
      %v487 = vld [vmem:[%s3 + $0x78] sm:$0xff]
      %v488 = vld [vmem:[%s3 + $0x80] sm:$0xf]
      %v489 = vld [vmem:[%s3 + $0x84] sm:$0xff]
      %v490 = vld [vmem:[%s3 + $0x8c] sm:$0xf]
      %v491 = vld [vmem:[%s3 + $0x90] sm:$0xff]
      %v492 = vld [vmem:[%s3 + $0x98] sm:$0xf]
      %v493 = vld [vmem:[%s3 + $0x9c] sm:$0xff]
      %v494 = vld [vmem:[%s3 + $0xa4] sm:$0xf]
      %v495 = vld [vmem:[%s3 + $0xa8] sm:$0xff]
      %v496 = vld [vmem:[%s3 + $0xb0] sm:$0xf]
      %v497 = vld [vmem:[%s3 + $0xb4] sm:$0xff]
      %v498 = vld [vmem:[%s3 + $0xbc] sm:$0xf]
      %v499 = vld [vmem:[%s4] sm:$0x7]
      %v501 = vlaneseq
      %v502 = vshrl.u32 %v501, 7
      %v503 = vsub.s32 0, %v502
      %v504 = vrot.slane %v499, %v503
      %v505 = vlaneseq
      %v506 = vshrl.u32 %v505, 7
      %v507 = vsub.s32 1, %v506
      %v508 = vrot.slane %v499, %v507
      %v509 = vlaneseq
      %v510 = vshrl.u32 %v509, 7
      %v511 = vsub.s32 2, %v510
      %v512 = vrot.slane %v499, %v511
      %v548 = vunpack.c.l.b16 %v467
      %v549 = vunpack.c.h.b16 %v467
      %v550 = vunpack.c.l.b16 %v468
      %v551 = vunpack.c.l.b16 %v469
      %v552 = vunpack.c.h.b16 %v469
      %v553 = vunpack.c.l.b16 %v470
      %v554 = vunpack.c.l.b16 %v471
      %v555 = vunpack.c.h.b16 %v471
      %v556 = vunpack.c.l.b16 %v472
      %v557 = vunpack.c.l.b16 %v473
      %v558 = vunpack.c.h.b16 %v473
      %v559 = vunpack.c.l.b16 %v474
      %v560 = vunpack.c.l.b16 %v475
      %v561 = vunpack.c.h.b16 %v475
      %v562 = vunpack.c.l.b16 %v476
      %v563 = vunpack.c.l.b16 %v477
      %v564 = vunpack.c.h.b16 %v477
      %v565 = vunpack.c.l.b16 %v478
      %v566 = vunpack.c.l.b16 %v479
      %v567 = vunpack.c.h.b16 %v479
      %v568 = vunpack.c.l.b16 %v480
      %v569 = vunpack.c.l.b16 %v481
      %v570 = vunpack.c.h.b16 %v481
      %v571 = vunpack.c.l.b16 %v482
      %v572 = vunpack.c.l.b16 %v483
      %v573 = vunpack.c.h.b16 %v483
      %v574 = vunpack.c.l.b16 %v484
      %v575 = vunpack.c.l.b16 %v485
      %v576 = vunpack.c.h.b16 %v485
      %v577 = vunpack.c.l.b16 %v486
      %v578 = vunpack.c.l.b16 %v487
      %v579 = vunpack.c.h.b16 %v487
      %v580 = vunpack.c.l.b16 %v488
      %v581 = vunpack.c.l.b16 %v489
      %v582 = vunpack.c.h.b16 %v489
      %v583 = vunpack.c.l.b16 %v490
      %v584 = vunpack.c.l.b16 %v491
      %v585 = vunpack.c.h.b16 %v491
      %v586 = vunpack.c.l.b16 %v492
      %v587 = vunpack.c.l.b16 %v493
      %v588 = vunpack.c.h.b16 %v493
      %v589 = vunpack.c.l.b16 %v494
      %v590 = vunpack.c.l.b16 %v495
      %v591 = vunpack.c.h.b16 %v495
      %v592 = vunpack.c.l.b16 %v496
      %v593 = vunpack.c.l.b16 %v497
      %v594 = vunpack.c.h.b16 %v497
      %v595 = vunpack.c.l.b16 %v498
      %v596 = vpack.c.b16 %v551, %v548
      %v597 = vpack.c.b16 %v552, %v549
      %v598 = vpack.c.b16 %v553, %v550
      %v599 = vpack.c.b16 %v557, %v554
      %v600 = vpack.c.b16 %v558, %v555
      %v601 = vpack.c.b16 %v559, %v556
      %v602 = vpack.c.b16 %v563, %v560
      %v603 = vpack.c.b16 %v564, %v561
      %v604 = vpack.c.b16 %v565, %v562
      %v605 = vpack.c.b16 %v569, %v566
      %v606 = vpack.c.b16 %v570, %v567
      %v607 = vpack.c.b16 %v571, %v568
      %v608 = vpack.c.b16 %v575, %v572
      %v609 = vpack.c.b16 %v576, %v573
      %v610 = vpack.c.b16 %v577, %v574
      %v611 = vpack.c.b16 %v581, %v578
      %v612 = vpack.c.b16 %v582, %v579
      %v613 = vpack.c.b16 %v583, %v580
      %v614 = vpack.c.b16 %v587, %v584
      %v615 = vpack.c.b16 %v588, %v585
      %v616 = vpack.c.b16 %v589, %v586
      %v617 = vpack.c.b16 %v593, %v590
      %v618 = vpack.c.b16 %v594, %v591
      %v619 = vpack.c.b16 %v595, %v592
      %644 = vmatprep.subr.bf16.mxu0 %v597
      %645 = vmatpush1.bf16.msra.mxu0 %v596
      %646 = vmatprep.subr.bf16.mxu0 %v600
      %647 = vmatpush1.bf16.msra.mxu0 %v599
      %648 = vmatprep.subr.bf16.mxu0 %v603
      %649 = vmatpush1.bf16.msra.mxu0 %v602
      %650 = vmatprep.subr.bf16.mxu0 %v606
      %651 = vmatpush1.bf16.msra.mxu0 %v605
      %652 = vmatprep.subr.bf16.mxu0 %v609
      %653 = vmatpush1.bf16.msra.mxu0 %v608
      %654 = vmatprep.subr.bf16.mxu0 %v612
      %655 = vmatpush1.bf16.msra.mxu0 %v611
      %656 = vmatprep.subr.bf16.mxu0 %v615
      %657 = vmatpush1.bf16.msra.mxu0 %v614
      %658 = vmatprep.subr.bf16.mxu0 %v618
      %659 = vmatpush1.bf16.msra.mxu0 %v617
      %660 = vmatprep.subr.bf16.mxu0 0
      %661 = vmatpush1.bf16.msra.mxu0 0
      %662 = vmatprep.subr.bf16.mxu0 0
      %663 = vmatpush1.bf16.msra.mxu0 0
      %664 = vmatprep.subr.bf16.mxu0 0
      %665 = vmatpush1.bf16.msra.mxu0 0
      %666 = vmatprep.subr.bf16.mxu0 0
      %667 = vmatpush1.bf16.msra.mxu0 0
      %668 = vmatprep.subr.bf16.mxu0 0
      %669 = vmatpush1.bf16.msra.mxu0 0
      %670 = vmatprep.subr.bf16.mxu0 0
      %671 = vmatpush1.bf16.msra.mxu0 0
      %672 = vmatprep.subr.bf16.mxu0 0
      %673 = vmatpush1.bf16.msra.mxu0 0
      %674 = vmatprep.subr.bf16.mxu0 0
      %675 = vmatpush1.bf16.msra.mxu0 0
      %676 = vmatprep.mubr.bf16.mxu0 0
      %677 = vmatmul.mubr.bf16.gmra.mrb[0].mxu0 %v466
      %v678 = vpop.f32.mrb[0].mxu0
      %v679 = vadd.f32 %v504, %v678
      %v680 = vpop.f32.mrb[0].mxu0
      %v681 = vadd.f32 %v508, %v680
      %v682 = vpop.f32.mrb[0].mxu0
      %v683 = vpop.f32.mrb[0].mxu0
      %684 = vdwg.mxu0
      %685 = vmatprep.subr.bf16.mxu0 0
      %686 = vmatpush1.bf16.msra.mxu0 %v598
      %687 = vmatprep.subr.bf16.mxu0 0
      %688 = vmatpush1.bf16.msra.mxu0 %v601
      %689 = vmatprep.subr.bf16.mxu0 0
      %690 = vmatpush1.bf16.msra.mxu0 %v604
      %691 = vmatprep.subr.bf16.mxu0 0
      %692 = vmatpush1.bf16.msra.mxu0 %v607
      %693 = vmatprep.subr.bf16.mxu0 0
      %694 = vmatpush1.bf16.msra.mxu0 %v610
      %695 = vmatprep.subr.bf16.mxu0 0
      %696 = vmatpush1.bf16.msra.mxu0 %v613
      %697 = vmatprep.subr.bf16.mxu0 0
      %698 = vmatpush1.bf16.msra.mxu0 %v616
      %699 = vmatprep.subr.bf16.mxu0 0
      %700 = vmatpush1.bf16.msra.mxu0 %v619
      %701 = vmatprep.subr.bf16.mxu0 0
      %702 = vmatpush1.bf16.msra.mxu0 0
      %703 = vmatprep.subr.bf16.mxu0 0
      %704 = vmatpush1.bf16.msra.mxu0 0
      %705 = vmatprep.subr.bf16.mxu0 0
      %706 = vmatpush1.bf16.msra.mxu0 0
      %707 = vmatprep.subr.bf16.mxu0 0
      %708 = vmatpush1.bf16.msra.mxu0 0
      %709 = vmatprep.subr.bf16.mxu0 0
      %710 = vmatpush1.bf16.msra.mxu0 0
      %711 = vmatprep.subr.bf16.mxu0 0
      %712 = vmatpush1.bf16.msra.mxu0 0
      %713 = vmatprep.subr.bf16.mxu0 0
      %714 = vmatpush1.bf16.msra.mxu0 0
      %715 = vmatprep.subr.bf16.mxu0 0
      %716 = vmatpush1.bf16.msra.mxu0 0
      %717 = vmatprep.mubr.bf16.mxu0 0
      %718 = vmatmul.mubr.bf16.gmra.mrb[0].mxu0 %v466
      %v719 = vpop.f32.mrb[0].mxu0
      %v720 = vadd.f32 %v512, %v719
      %v721 = vpop.f32.mrb[0].mxu0
      %v722 = vpop.f32.mrb[0].mxu0
      %v723 = vpop.f32.mrb[0].mxu0
      %724 = vdwg.mxu0
      %v725 = vmul.f32 %v679, 0.125
      %727 = vrot.lane.b32.xlu0 %v725, 64
      %v728 = vpop.permute.xlu0 %727
      %v730 = vpack.c.bf16 %v725, %v725
      %v731 = vpack.c.bf16 %v728, %v728
      %733 = vrot.lane.b32.xlu0 %v681, 64
      %v734 = vpop.permute.xlu0 %733
      %v736 = vpack.c.bf16 %v681, %v681
      %v737 = vpack.c.bf16 %v734, %v734
      %739 = vrot.lane.b32.xlu0 %v720, 64
      %v740 = vpop.permute.xlu0 %739
      %v742 = vpack.c.bf16 %v720, %v720
      %v743 = vpack.c.bf16 %v740, %v740
      %vm744 = vcmask 523264
      %v746 = vsel %vm744, %v730, 0
      %v749 = vsel %vm744, %v736, 0
      %751 = vmatprep.subr.bf16.mxu0 0
      %752 = vmatpush1.bf16.xpose.msra.mxu0 %v749
      %753 = vmatprep.subr.bf16.mxu0 0
      %754 = vmatpush1.bf16.xpose.msra.mxu0 0
      %755 = vmatprep.subr.bf16.mxu0 0
      %756 = vmatpush1.bf16.xpose.msra.mxu0 0
      %757 = vmatprep.subr.bf16.mxu0 0
      %758 = vmatpush1.bf16.xpose.msra.mxu0 0
      %759 = vmatprep.subr.bf16.mxu0 0
      %760 = vmatpush1.bf16.xpose.msra.mxu0 0
      %761 = vmatprep.subr.bf16.mxu0 0
      %762 = vmatpush1.bf16.xpose.msra.mxu0 0
      %763 = vmatprep.subr.bf16.mxu0 0
      %764 = vmatpush1.bf16.xpose.msra.mxu0 0
      %765 = vmatprep.subr.bf16.mxu0 0
      %766 = vmatpush1.bf16.xpose.msra.mxu0 0
      %767 = vmatprep.subr.bf16.mxu0 0
      %768 = vmatpush1.bf16.xpose.msra.mxu0 0
      %769 = vmatprep.subr.bf16.mxu0 0
      %770 = vmatpush1.bf16.xpose.msra.mxu0 0
      %771 = vmatprep.subr.bf16.mxu0 0
      %772 = vmatpush1.bf16.xpose.msra.mxu0 0
      %773 = vmatprep.subr.bf16.mxu0 0
      %774 = vmatpush1.bf16.xpose.msra.mxu0 0
      %775 = vmatprep.subr.bf16.mxu0 0
      %776 = vmatpush1.bf16.xpose.msra.mxu0 0
      %777 = vmatprep.subr.bf16.mxu0 0
      %778 = vmatpush1.bf16.xpose.msra.mxu0 0
      %779 = vmatprep.subr.bf16.mxu0 0
      %780 = vmatpush1.bf16.xpose.msra.mxu0 0
      %781 = vmatprep.subr.bf16.mxu0 0
      %782 = vmatpush1.bf16.xpose.msra.mxu0 0
      %783 = vmatprep.mubr.bf16.mxu0 0
      %784 = vmatmul.mubr.bf16.gmra.mrb[0].mxu0 %v746
      %v785 = vpop.f32.mrb[0].mxu0
      %v786 = vadd.f32 0.0, %v785
      %v787 = vpop.f32.mrb[0].mxu0
      %v788 = vpop.f32.mrb[0].mxu0
      %v789 = vpop.f32.mrb[0].mxu0
      %790 = vdwg.mxu0
      %v792 = vsel %vm744, %v731, 0
      %v795 = vsel %vm744, %v737, 0
      %797 = vmatprep.subr.bf16.mxu0 0
      %798 = vmatpush1.bf16.xpose.msra.mxu0 %v795
      %799 = vmatprep.subr.bf16.mxu0 0
      %800 = vmatpush1.bf16.xpose.msra.mxu0 0
      %801 = vmatprep.subr.bf16.mxu0 0
      %802 = vmatpush1.bf16.xpose.msra.mxu0 0
      %803 = vmatprep.subr.bf16.mxu0 0
      %804 = vmatpush1.bf16.xpose.msra.mxu0 0
      %805 = vmatprep.subr.bf16.mxu0 0
      %806 = vmatpush1.bf16.xpose.msra.mxu0 0
      %807 = vmatprep.subr.bf16.mxu0 0
      %808 = vmatpush1.bf16.xpose.msra.mxu0 0
      %809 = vmatprep.subr.bf16.mxu0 0
      %810 = vmatpush1.bf16.xpose.msra.mxu0 0
      %811 = vmatprep.subr.bf16.mxu0 0
      %812 = vmatpush1.bf16.xpose.msra.mxu0 0
      %813 = vmatprep.subr.bf16.mxu0 0
      %814 = vmatpush1.bf16.xpose.msra.mxu0 0
      %815 = vmatprep.subr.bf16.mxu0 0
      %816 = vmatpush1.bf16.xpose.msra.mxu0 0
      %817 = vmatprep.subr.bf16.mxu0 0
      %818 = vmatpush1.bf16.xpose.msra.mxu0 0
      %819 = vmatprep.subr.bf16.mxu0 0
      %820 = vmatpush1.bf16.xpose.msra.mxu0 0
      %821 = vmatprep.subr.bf16.mxu0 0
      %822 = vmatpush1.bf16.xpose.msra.mxu0 0
      %823 = vmatprep.subr.bf16.mxu0 0
      %824 = vmatpush1.bf16.xpose.msra.mxu0 0
      %825 = vmatprep.subr.bf16.mxu0 0
      %826 = vmatpush1.bf16.xpose.msra.mxu0 0
      %827 = vmatprep.subr.bf16.mxu0 0
      %828 = vmatpush1.bf16.xpose.msra.mxu0 0
      %829 = vmatprep.mubr.bf16.mxu0 0
      %830 = vmatmul.mubr.bf16.gmra.mrb[0].mxu0 %v792
      %v831 = vpop.f32.mrb[0].mxu0
      %v832 = vadd.f32 0.0, %v831
      %v833 = vpop.f32.mrb[0].mxu0
      %v834 = vpop.f32.mrb[0].mxu0
      %v835 = vpop.f32.mrb[0].mxu0
      %836 = vdwg.mxu0
      %vm837 = vcmask 64512
      %v838 = vsel %vm837, %v786, -inf
      %839 = vmax.xlane.f32.xlu0 %v838
      %v840 = vpop.xlane.xlu0 %839
      %v841 = vsel %vm837, %v832, -inf
      %842 = vmax.xlane.f32.xlu0 %v841
      %v843 = vpop.xlane.xlu0 %842
      %v844 = vsub.f32 %v786, %v840
      %v845 = vsub.f32 %v832, %v843
      %v846 = vmul.f32 %v844, 1.442695
      %v847 = vpow.pop %v846
      %v848 = vmul.f32 %v845, 1.442695
      %v849 = vpow.pop %v848
      %v850 = vsel %vm837, %v847, 0.0
      %851 = vadd.xlane.f32.xlu0 %v850
      %v852 = vpop.xlane.xlu0 %851
      %v853 = vsel %vm837, %v849, 0.0
      %854 = vadd.xlane.f32.xlu0 %v853
      %v855 = vpop.xlane.xlu0 %854
      %v856 = vrcp.pop %v852
      %v857 = vrcp.pop %v855
      %v858 = vmul.f32 %v847, %v856
      %v859 = vmul.f32 %v849, %v857
      %v860 = vpack.c.bf16 %v858, %v858
      %v861 = vpack.c.bf16 %v859, %v859
      %v863 = vsel %vm837, %v860, 0
      %vm865 = vcmask 1043456
      %v867 = vsel %vm865, %v742, 0
      %869 = vmatprep.subr.bf16.mxu0 0
      %870 = vmatpush1.bf16.msra.mxu0 %v867
      %871 = vmatprep.subr.bf16.mxu0 0
      %872 = vmatpush1.bf16.msra.mxu0 0
      %873 = vmatprep.subr.bf16.mxu0 0
      %874 = vmatpush1.bf16.msra.mxu0 0
      %875 = vmatprep.subr.bf16.mxu0 0
      %876 = vmatpush1.bf16.msra.mxu0 0
      %877 = vmatprep.subr.bf16.mxu0 0
      %878 = vmatpush1.bf16.msra.mxu0 0
      %879 = vmatprep.subr.bf16.mxu0 0
      %880 = vmatpush1.bf16.msra.mxu0 0
      %881 = vmatprep.subr.bf16.mxu0 0
      %882 = vmatpush1.bf16.msra.mxu0 0
      %883 = vmatprep.subr.bf16.mxu0 0
      %884 = vmatpush1.bf16.msra.mxu0 0
      %885 = vmatprep.subr.bf16.mxu0 0
      %886 = vmatpush1.bf16.msra.mxu0 0
      %887 = vmatprep.subr.bf16.mxu0 0
      %888 = vmatpush1.bf16.msra.mxu0 0
      %889 = vmatprep.subr.bf16.mxu0 0
      %890 = vmatpush1.bf16.msra.mxu0 0
      %891 = vmatprep.subr.bf16.mxu0 0
      %892 = vmatpush1.bf16.msra.mxu0 0
      %893 = vmatprep.subr.bf16.mxu0 0
      %894 = vmatpush1.bf16.msra.mxu0 0
      %895 = vmatprep.subr.bf16.mxu0 0
      %896 = vmatpush1.bf16.msra.mxu0 0
      %897 = vmatprep.subr.bf16.mxu0 0
      %898 = vmatpush1.bf16.msra.mxu0 0
      %899 = vmatprep.subr.bf16.mxu0 0
      %900 = vmatpush1.bf16.msra.mxu0 0
      %901 = vmatprep.mubr.bf16.mxu0 0
      %902 = vmatmul.mubr.bf16.gmra.mrb[0].mxu0 %v863
      %v903 = vpop.f32.mrb[0].mxu0
      %v904 = vadd.f32 0.0, %v903
      %v905 = vpop.f32.mrb[0].mxu0
      %v906 = vpop.f32.mrb[0].mxu0
      %v907 = vpop.f32.mrb[0].mxu0
      %908 = vdwg.mxu0
      %v910 = vsel %vm837, %v861, 0
      %v913 = vsel %vm865, %v743, 0
      %915 = vmatprep.subr.bf16.mxu0 0
      %916 = vmatpush1.bf16.msra.mxu0 %v913
      %917 = vmatprep.subr.bf16.mxu0 0
      %918 = vmatpush1.bf16.msra.mxu0 0
      %919 = vmatprep.subr.bf16.mxu0 0
      %920 = vmatpush1.bf16.msra.mxu0 0
      %921 = vmatprep.subr.bf16.mxu0 0
      %922 = vmatpush1.bf16.msra.mxu0 0
      %923 = vmatprep.subr.bf16.mxu0 0
      %924 = vmatpush1.bf16.msra.mxu0 0
      %925 = vmatprep.subr.bf16.mxu0 0
      %926 = vmatpush1.bf16.msra.mxu0 0
      %927 = vmatprep.subr.bf16.mxu0 0
      %928 = vmatpush1.bf16.msra.mxu0 0
      %929 = vmatprep.subr.bf16.mxu0 0
      %930 = vmatpush1.bf16.msra.mxu0 0
      %931 = vmatprep.subr.bf16.mxu0 0
      %932 = vmatpush1.bf16.msra.mxu0 0
      %933 = vmatprep.subr.bf16.mxu0 0
      %934 = vmatpush1.bf16.msra.mxu0 0
      %935 = vmatprep.subr.bf16.mxu0 0
      %936 = vmatpush1.bf16.msra.mxu0 0
      %937 = vmatprep.subr.bf16.mxu0 0
      %938 = vmatpush1.bf16.msra.mxu0 0
      %939 = vmatprep.subr.bf16.mxu0 0
      %940 = vmatpush1.bf16.msra.mxu0 0
      %941 = vmatprep.subr.bf16.mxu0 0
      %942 = vmatpush1.bf16.msra.mxu0 0
      %943 = vmatprep.subr.bf16.mxu0 0
      %944 = vmatpush1.bf16.msra.mxu0 0
      %945 = vmatprep.subr.bf16.mxu0 0
      %946 = vmatpush1.bf16.msra.mxu0 0
      %947 = vmatprep.mubr.bf16.mxu0 0
      %948 = vmatmul.mubr.bf16.gmra.mrb[0].mxu0 %v910
      %v949 = vpop.f32.mrb[0].mxu0
      %v950 = vadd.f32 0.0, %v949
      %v951 = vpop.f32.mrb[0].mxu0
      %v952 = vpop.f32.mrb[0].mxu0
      %v953 = vpop.f32.mrb[0].mxu0
      %954 = vdwg.mxu0
      %956 = vrot.lane.b32.xlu0 %v950, 64
      %v957 = vpop.permute.xlu0 %956
      %v959 = vsel %vm744, %v904, %v957
      %v960 = vpack.c.bf16 %v959, %v959
      %v961 = vld [vmem:[%s5] sm:$0xf]
      %v962 = vld [vmem:[%s5 + $0x4] sm:$0xf]
      %v963 = vld [vmem:[%s5 + $0x8] sm:$0xf]
      %v964 = vld [vmem:[%s5 + $0xc] sm:$0xf]
      %v965 = vld [vmem:[%s5 + $0x10] sm:$0xf]
      %v966 = vld [vmem:[%s5 + $0x14] sm:$0xf]
      %v967 = vld [vmem:[%s5 + $0x18] sm:$0xf]
      %v968 = vld [vmem:[%s5 + $0x1c] sm:$0xf]
      %v969 = vld [vmem:[%s5 + $0x20] sm:$0xf]
      %v970 = vld [vmem:[%s5 + $0x24] sm:$0xf]
      %v971 = vld [vmem:[%s5 + $0x28] sm:$0xf]
      %v972 = vld [vmem:[%s5 + $0x2c] sm:$0xf]
      %v973 = vld [vmem:[%s5 + $0x30] sm:$0xf]
      %v974 = vld [vmem:[%s5 + $0x34] sm:$0xf]
      %v975 = vld [vmem:[%s5 + $0x38] sm:$0xf]
      %v976 = vld [vmem:[%s5 + $0x3c] sm:$0xf]
      %v977 = vld [vmem:[%s6] sm:$0x1]
      %v979 = vlaneseq
      %v980 = vshrl.u32 %v979, 7
      %v981 = vsub.s32 0, %v980
      %v982 = vrot.slane %v977, %v981
      %v1000 = vunpack.c.l.b16 %v961
      %v1001 = vunpack.c.l.b16 %v962
      %v1002 = vunpack.c.l.b16 %v963
      %v1003 = vunpack.c.l.b16 %v964
      %v1004 = vunpack.c.l.b16 %v965
      %v1005 = vunpack.c.l.b16 %v966
      %v1006 = vunpack.c.l.b16 %v967
      %v1007 = vunpack.c.l.b16 %v968
      %v1008 = vunpack.c.l.b16 %v969
      %v1009 = vunpack.c.l.b16 %v970
      %v1010 = vunpack.c.l.b16 %v971
      %v1011 = vunpack.c.l.b16 %v972
      %v1012 = vunpack.c.l.b16 %v973
      %v1013 = vunpack.c.l.b16 %v974
      %v1014 = vunpack.c.l.b16 %v975
      %v1015 = vunpack.c.l.b16 %v976
      %v1016 = vpack.c.b16 %v1001, %v1000
      %v1017 = vpack.c.b16 %v1003, %v1002
      %v1018 = vpack.c.b16 %v1005, %v1004
      %v1019 = vpack.c.b16 %v1007, %v1006
      %v1020 = vpack.c.b16 %v1009, %v1008
      %v1021 = vpack.c.b16 %v1011, %v1010
      %v1022 = vpack.c.b16 %v1013, %v1012
      %v1023 = vpack.c.b16 %v1015, %v1014
      %1032 = vmatprep.subr.bf16.mxu0 0
      %1033 = vmatpush1.bf16.msra.mxu0 %v1016
      %1034 = vmatprep.subr.bf16.mxu0 0
      %1035 = vmatpush1.bf16.msra.mxu0 %v1017
      %1036 = vmatprep.subr.bf16.mxu0 0
      %1037 = vmatpush1.bf16.msra.mxu0 %v1018
      %1038 = vmatprep.subr.bf16.mxu0 0
      %1039 = vmatpush1.bf16.msra.mxu0 %v1019
      %1040 = vmatprep.subr.bf16.mxu0 0
      %1041 = vmatpush1.bf16.msra.mxu0 %v1020
      %1042 = vmatprep.subr.bf16.mxu0 0
      %1043 = vmatpush1.bf16.msra.mxu0 %v1021
      %1044 = vmatprep.subr.bf16.mxu0 0
      %1045 = vmatpush1.bf16.msra.mxu0 %v1022
      %1046 = vmatprep.subr.bf16.mxu0 0
      %1047 = vmatpush1.bf16.msra.mxu0 %v1023
      %1048 = vmatprep.subr.bf16.mxu0 0
      %1049 = vmatpush1.bf16.msra.mxu0 0
      %1050 = vmatprep.subr.bf16.mxu0 0
      %1051 = vmatpush1.bf16.msra.mxu0 0
      %1052 = vmatprep.subr.bf16.mxu0 0
      %1053 = vmatpush1.bf16.msra.mxu0 0
      %1054 = vmatprep.subr.bf16.mxu0 0
      %1055 = vmatpush1.bf16.msra.mxu0 0
      %1056 = vmatprep.subr.bf16.mxu0 0
      %1057 = vmatpush1.bf16.msra.mxu0 0
      %1058 = vmatprep.subr.bf16.mxu0 0
      %1059 = vmatpush1.bf16.msra.mxu0 0
      %1060 = vmatprep.subr.bf16.mxu0 0
      %1061 = vmatpush1.bf16.msra.mxu0 0
      %1062 = vmatprep.subr.bf16.mxu0 0
      %1063 = vmatpush1.bf16.msra.mxu0 0
      %1064 = vmatprep.mubr.bf16.mxu0 0
      %1065 = vmatmul.mubr.bf16.gmra.mrb[0].mxu0 %v960
      %v1066 = vpop.f32.mrb[0].mxu0
      %v1067 = vadd.f32 %v982, %v1066
      %v1068 = vpop.f32.mrb[0].mxu0
      %v1069 = vpop.f32.mrb[0].mxu0
      %v1070 = vpop.f32.mrb[0].mxu0
      %1071 = vdwg.mxu0
      %v1072 = vadd.f32 %v437, %v1067
      %1073 = vadd.xlane.f32.xlu0 %v1072
      %v1074 = vpop.xlane.xlu0 %1073
      %v1075 = vmul.f32 %v1074, %v440
      %v1076 = vsub.f32 %v1072, %v1075
      %v1077 = vmul.f32 %v1076, %v1076
      %1078 = vadd.xlane.f32.xlu0 %v1077
      %v1079 = vpop.xlane.xlu0 %1078
      %v1080 = vmul.f32 %v1079, %v440
      %v1081 = vadd.f32 %v1080, 1e-05
      %v1082 = vrsqrt.pop %v1081
      %v1083 = vmul.f32 %v1076, %v1082
      %v1084 = vld [vmem:[%s7] sm:$0x1]
      %v1086 = vlaneseq
      %v1087 = vshrl.u32 %v1086, 7
      %v1088 = vsub.s32 0, %v1087
      %v1089 = vrot.slane %v1084, %v1088
      %v1091 = vmul.f32 %v1083, %v1089
      %v1092 = vld [vmem:[%s8] sm:$0x1]
      %v1094 = vlaneseq
      %v1095 = vshrl.u32 %v1094, 7
      %v1096 = vsub.s32 0, %v1095
      %v1097 = vrot.slane %v1092, %v1096
      %v1099 = vadd.f32 %v1091, %v1097
      %v1100 = vpack.c.bf16 %v1099, %v1099
      %v1101 = vld [vmem:[%s9] sm:$0xf]
      %v1102 = vld [vmem:[%s9 + $0x4] sm:$0xf]
      %v1103 = vld [vmem:[%s9 + $0x8] sm:$0xf]
      %v1104 = vld [vmem:[%s9 + $0xc] sm:$0xf]
      %v1105 = vld [vmem:[%s9 + $0x10] sm:$0xf]
      %v1106 = vld [vmem:[%s9 + $0x14] sm:$0xf]
      %v1107 = vld [vmem:[%s9 + $0x18] sm:$0xf]
      %v1108 = vld [vmem:[%s9 + $0x1c] sm:$0xf]
      %v1109 = vld [vmem:[%s9 + $0x20] sm:$0xf]
      %v1110 = vld [vmem:[%s9 + $0x24] sm:$0xf]
      %v1111 = vld [vmem:[%s9 + $0x28] sm:$0xf]
      %v1112 = vld [vmem:[%s9 + $0x2c] sm:$0xf]
      %v1113 = vld [vmem:[%s9 + $0x30] sm:$0xf]
      %v1114 = vld [vmem:[%s9 + $0x34] sm:$0xf]
      %v1115 = vld [vmem:[%s9 + $0x38] sm:$0xf]
      %v1116 = vld [vmem:[%s9 + $0x3c] sm:$0xf]
      %v1117 = vld [vmem:[%s10] sm:$0x1]
      %v1119 = vlaneseq
      %v1120 = vshrl.u32 %v1119, 7
      %v1121 = vsub.s32 0, %v1120
      %v1122 = vrot.slane %v1117, %v1121
      %v1140 = vunpack.c.l.b16 %v1101
      %v1141 = vunpack.c.l.b16 %v1102
      %v1142 = vunpack.c.l.b16 %v1103
      %v1143 = vunpack.c.l.b16 %v1104
      %v1144 = vunpack.c.l.b16 %v1105
      %v1145 = vunpack.c.l.b16 %v1106
      %v1146 = vunpack.c.l.b16 %v1107
      %v1147 = vunpack.c.l.b16 %v1108
      %v1148 = vunpack.c.l.b16 %v1109
      %v1149 = vunpack.c.l.b16 %v1110
      %v1150 = vunpack.c.l.b16 %v1111
      %v1151 = vunpack.c.l.b16 %v1112
      %v1152 = vunpack.c.l.b16 %v1113
      %v1153 = vunpack.c.l.b16 %v1114
      %v1154 = vunpack.c.l.b16 %v1115
      %v1155 = vunpack.c.l.b16 %v1116
      %v1156 = vpack.c.b16 %v1141, %v1140
      %v1157 = vpack.c.b16 %v1143, %v1142
      %v1158 = vpack.c.b16 %v1145, %v1144
      %v1159 = vpack.c.b16 %v1147, %v1146
      %v1160 = vpack.c.b16 %v1149, %v1148
      %v1161 = vpack.c.b16 %v1151, %v1150
      %v1162 = vpack.c.b16 %v1153, %v1152
      %v1163 = vpack.c.b16 %v1155, %v1154
      %1172 = vmatprep.subr.bf16.mxu0 0
      %1173 = vmatpush1.bf16.msra.mxu0 %v1156
      %1174 = vmatprep.subr.bf16.mxu0 0
      %1175 = vmatpush1.bf16.msra.mxu0 %v1157
      %1176 = vmatprep.subr.bf16.mxu0 0
      %1177 = vmatpush1.bf16.msra.mxu0 %v1158
      %1178 = vmatprep.subr.bf16.mxu0 0
      %1179 = vmatpush1.bf16.msra.mxu0 %v1159
      %1180 = vmatprep.subr.bf16.mxu0 0
      %1181 = vmatpush1.bf16.msra.mxu0 %v1160
      %1182 = vmatprep.subr.bf16.mxu0 0
      %1183 = vmatpush1.bf16.msra.mxu0 %v1161
      %1184 = vmatprep.subr.bf16.mxu0 0
      %1185 = vmatpush1.bf16.msra.mxu0 %v1162
      %1186 = vmatprep.subr.bf16.mxu0 0
      %1187 = vmatpush1.bf16.msra.mxu0 %v1163
      %1188 = vmatprep.subr.bf16.mxu0 0
      %1189 = vmatpush1.bf16.msra.mxu0 0
      %1190 = vmatprep.subr.bf16.mxu0 0
      %1191 = vmatpush1.bf16.msra.mxu0 0
      %1192 = vmatprep.subr.bf16.mxu0 0
      %1193 = vmatpush1.bf16.msra.mxu0 0
      %1194 = vmatprep.subr.bf16.mxu0 0
      %1195 = vmatpush1.bf16.msra.mxu0 0
      %1196 = vmatprep.subr.bf16.mxu0 0
      %1197 = vmatpush1.bf16.msra.mxu0 0
      %1198 = vmatprep.subr.bf16.mxu0 0
      %1199 = vmatpush1.bf16.msra.mxu0 0
      %1200 = vmatprep.subr.bf16.mxu0 0
      %1201 = vmatpush1.bf16.msra.mxu0 0
      %1202 = vmatprep.subr.bf16.mxu0 0
      %1203 = vmatpush1.bf16.msra.mxu0 0
      %1204 = vmatprep.mubr.bf16.mxu0 0
      %1205 = vmatmul.mubr.bf16.gmra.mrb[0].mxu0 %v1100
      %v1206 = vpop.f32.mrb[0].mxu0
      %v1207 = vadd.f32 %v1122, %v1206
      %v1208 = vpop.f32.mrb[0].mxu0
      %v1209 = vpop.f32.mrb[0].mxu0
      %v1210 = vpop.f32.mrb[0].mxu0
      %1211 = vdwg.mxu0
      %v1212 = vmax.f32 %v1207, 0.0
      %v1213 = vpack.c.bf16 %v1212, %v1212
      %v1214 = vld [vmem:[%s11] sm:$0xf]
      %v1215 = vld [vmem:[%s11 + $0x4] sm:$0xf]
      %v1216 = vld [vmem:[%s11 + $0x8] sm:$0xf]
      %v1217 = vld [vmem:[%s11 + $0xc] sm:$0xf]
      %v1218 = vld [vmem:[%s12] sm:$0x1]
      %v1220 = vlaneseq
      %v1221 = vshrl.u32 %v1220, 7
      %v1222 = vsub.s32 0, %v1221
      %v1223 = vrot.slane %v1218, %v1222
      %v1229 = vunpack.c.l.b16 %v1214
      %v1230 = vunpack.c.l.b16 %v1215
      %v1231 = vunpack.c.l.b16 %v1216
      %v1232 = vunpack.c.l.b16 %v1217
      %v1233 = vpack.c.b16 %v1230, %v1229
      %v1234 = vpack.c.b16 %v1232, %v1231
      %vm1237 = vcmask 261120
      %v1239 = vsel %vm1237, %v1213, 0
      %1241 = vmatprep.subr.bf16.mxu0 0
      %1242 = vmatpush1.bf16.msra.mxu0 %v1233
      %1243 = vmatprep.subr.bf16.mxu0 0
      %1244 = vmatpush1.bf16.msra.mxu0 %v1234
      %1245 = vmatprep.subr.bf16.mxu0 0
      %1246 = vmatpush1.bf16.msra.mxu0 0
      %1247 = vmatprep.subr.bf16.mxu0 0
      %1248 = vmatpush1.bf16.msra.mxu0 0
      %1249 = vmatprep.subr.bf16.mxu0 0
      %1250 = vmatpush1.bf16.msra.mxu0 0
      %1251 = vmatprep.subr.bf16.mxu0 0
      %1252 = vmatpush1.bf16.msra.mxu0 0
      %1253 = vmatprep.subr.bf16.mxu0 0
      %1254 = vmatpush1.bf16.msra.mxu0 0
      %1255 = vmatprep.subr.bf16.mxu0 0
      %1256 = vmatpush1.bf16.msra.mxu0 0
      %1257 = vmatprep.subr.bf16.mxu0 0
      %1258 = vmatpush1.bf16.msra.mxu0 0
      %1259 = vmatprep.subr.bf16.mxu0 0
      %1260 = vmatpush1.bf16.msra.mxu0 0
      %1261 = vmatprep.subr.bf16.mxu0 0
      %1262 = vmatpush1.bf16.msra.mxu0 0
      %1263 = vmatprep.subr.bf16.mxu0 0
      %1264 = vmatpush1.bf16.msra.mxu0 0
      %1265 = vmatprep.subr.bf16.mxu0 0
      %1266 = vmatpush1.bf16.msra.mxu0 0
      %1267 = vmatprep.subr.bf16.mxu0 0
      %1268 = vmatpush1.bf16.msra.mxu0 0
      %1269 = vmatprep.subr.bf16.mxu0 0
      %1270 = vmatpush1.bf16.msra.mxu0 0
      %1271 = vmatprep.subr.bf16.mxu0 0
      %1272 = vmatpush1.bf16.msra.mxu0 0
      %1273 = vmatprep.mubr.bf16.mxu0 0
      %1274 = vmatmul.mubr.bf16.gmra.mrb[0].mxu0 %v1239
      %v1275 = vpop.f32.mrb[0].mxu0
      %v1276 = vadd.f32 %v1223, %v1275
      %v1277 = vpop.f32.mrb[0].mxu0
      %v1278 = vpop.f32.mrb[0].mxu0
      %v1279 = vpop.f32.mrb[0].mxu0
      %1280 = vdwg.mxu0
      %v1281 = vadd.f32 %v1072, %v1276
      %1282 = vst [vmem:[%s435] sm:$0xff] %v1281
      %p1283 = scmp.lt.s32.totalorder %s24, 1
      %s1284 = scalar_select %p1283, %s24, 1
      %s1285 = smul.addr %s1284, 8
      %s1286 = scalar_lea.vmem %s13, %s1285
      // Predicated region
      $region73: #{conv_transformer_forward.5} parent=71 // pred_check
        %p1287 = pneg %p320
      $region74: #{conv_transformer_forward.5} parent=71 // pred_check_branch
        %1289 = sbr.rel (%p1287) target = $region76
      $region75: #{conv_transformer_forward.5} parent=71 // pred_region
        _
      $region76: #{conv_transformer_forward.5} parent=71 // pred_fallthru
        _
    $region72: #{conv_transformer_forward.5} parent=5 // pred_fallthru
      _
    %p1290 = scmp.le.s32.totalorder 2, %s19
    // Predicated region
    $region77: #{conv_transformer_forward.5} parent=5 // pred_check
      %p1291 = pneg %p1290
    $region78: #{conv_transformer_forward.5} parent=5 // pred_check_branch
      %1293 = sbr.rel (%p1291) target = $region80
    $region79: #{conv_transformer_forward.5} parent=5 // pred_region
      %s1294 = ssub.s32 %s19, 2
      // Predicated region
      $region81: #{conv_transformer_forward.5} parent=79 // pred_check
        %p1295 = pneg %p326
      $region82: #{conv_transformer_forward.5} parent=79 // pred_check_branch
        %1297 = sbr.rel (%p1295) target = $region84
      $region83: #{conv_transformer_forward.5} parent=79 // pred_region
        %p1298 = scmp.lt.s32.totalorder %s25, 1
        %s1299 = scalar_select %p1298, %s25, 1
        %s1300 = smul.addr %s1299, 8
        %s1301 = scalar_lea.vmem %s13, %s1300
      $region84: #{conv_transformer_forward.5} parent=79 // pred_fallthru
        _
    $region80: #{conv_transformer_forward.5} parent=5 // pred_fallthru
      _
  $region6: #{conv_transformer_forward.5} parent=0 // loop_footer
    %s23 = sadd.s32 1, %s19
  $region7: #{conv_transformer_forward.5} parent=0 // loop_footer_branch
    %18 = sbr.rel target = $region3
  $region8: #{conv_transformer_forward.5} parent=0 // loop_exit
    _

</llo_original>
